<compile_context>
chip_gen: v5e
topology: v5e:2x2
jax: 0.10.0
libtpu: 0.0.40
codegen_flags: <defaults>
</compile_context>

<pallas_src>
import functools

import jax
import jax.numpy as jnp
from jax.experimental import pallas as pl
from jax.experimental.pallas import tpu as pltpu


_IN_CH = 3
_IN_CH_PAD = 8          # conv1 K = 4*4*8 = 128 -> lane-dense MXU contraction
_VMEM_LIMIT = 32 * 1024 * 1024


def _round_up(x, m):
    return (x + m - 1) // m * m


# ----------------------------------------------------------------------------
# Pallas kernel 1: fused  out = act(x @ w + b)  (MXU, bf16 in / f32 accum / bf16 out)
# ----------------------------------------------------------------------------
def _matmul_bias_act_kernel(x_ref, w_ref, b_ref, o_ref, *, act):
    acc = jnp.dot(x_ref[...], w_ref[...], preferred_element_type=jnp.float32)
    acc = acc + b_ref[...]                      # (1, N) f32 bias broadcasts over rows
    if act == "relu":
        acc = jnp.maximum(acc, 0.0)
    o_ref[...] = acc.astype(o_ref.dtype)


def matmul_bias_act(x, w, b, act, *, out_dtype=jnp.bfloat16, tm_max=1024):
    """act(x @ w + b). x:[M,K] bf16, w:[K,N] bf16 (pre-packed), b:[1,N] f32.

    Only M is tiled (K and N stay full-extent per block; they fit VMEM comfortably at
    these layer widths).  Whenever M > 8 at least two M-tiles are emitted so the
    "parallel" grid axis shards across v7x's two TensorCores.  The last M-block may be
    partial; Pallas masks the boundary block on writeback, so no padding copy is done.
    The weight BlockSpec has a constant index_map, so it is fetched once and stays
    resident across M-tiles (single-buffering it via pl.Buffered(1) would save another
    ~K*N*2 bytes of VMEM headroom on v7x if ever needed).
    """
    M, K = x.shape
    K2, N = w.shape
    assert K == K2 and b.shape == (1, N)
    if x.dtype != jnp.bfloat16:                 # never triggers in this model
        x = x.astype(jnp.bfloat16)
    assert w.dtype == jnp.bfloat16

    if M <= 8:
        tm = M                                  # single full-extent block (legal)
    else:
        tm = min(tm_max, _round_up((M + 1) // 2, 8))   # >= 2 tiles for v7x megacore

    kernel = functools.partial(_matmul_bias_act_kernel, act=act)
    return pl.pallas_call(
        kernel,
        out_shape=jax.ShapeDtypeStruct((M, N), out_dtype),
        grid=(pl.cdiv(M, tm),),
        in_specs=[
            pl.BlockSpec((tm, K), lambda i: (i, 0)),
            pl.BlockSpec((K, N), lambda i: (0, 0)),
            pl.BlockSpec((1, N), lambda i: (0, 0)),
        ],
        out_specs=pl.BlockSpec((tm, N), lambda i: (i, 0)),
        compiler_params=pltpu.CompilerParams(
            dimension_semantics=("parallel",),          # v7x: M-tiles across 2 TCs
            vmem_limit_bytes=_VMEM_LIMIT),
    )(x, w, b)


# ----------------------------------------------------------------------------
# Pallas kernel 2: Linear(N=1) + Sigmoid as a K-tiled VPU/XLU reduction
# ----------------------------------------------------------------------------
def _linear_sigmoid_kernel(x_ref, w_ref, b_ref, o_ref, acc_ref):
    k = pl.program_id(0)

    @pl.when(k == 0)
    def _():
        acc_ref[...] = jnp.zeros_like(acc_ref)

    prod = x_ref[...].astype(jnp.float32) * w_ref[...].astype(jnp.float32)  # [M,TK]
    acc_ref[...] += jnp.sum(prod, axis=-1, keepdims=True)                   # f32 accum

    @pl.when(k == pl.num_programs(0) - 1)
    def _():
        o_ref[...] = jax.nn.sigmoid(acc_ref[...] + b_ref[...])


def _choose_tk(K, cap=2048):
    if K <= cap:
        return K
    for tk in range(cap, 0, -128):              # biggest lane-dense divisor of K
        if K % tk == 0:
            return tk
    return K                                    # fallback: single full-extent block


def linear_sigmoid(x, w_row, b):
    """sigmoid(x @ w_row.T + b). x:[M,K] bf16, w_row:[1,K] bf16, b:[1,1] f32 -> [M,1] f32.

    N = 1, so this is a VPU multiply + XLU cross-lane reduce rather than a wasteful
    1-column MXU matmul.  K is tiled so the x / w DMAs double-buffer and VMEM use stays
    bounded even for IMG=224-sized flat (~200K).
    """
    M, K = x.shape
    assert w_row.shape == (1, K) and b.shape == (1, 1)
    tk = _choose_tk(K)
    return pl.pallas_call(
        _linear_sigmoid_kernel,
        out_shape=jax.ShapeDtypeStruct((M, 1), jnp.float32),
        grid=(K // tk,),
        in_specs=[
            pl.BlockSpec((M, tk), lambda k: (0, k)),
            pl.BlockSpec((1, tk), lambda k: (0, k)),
            pl.BlockSpec((1, 1), lambda k: (0, 0)),
        ],
        out_specs=pl.BlockSpec((M, 1), lambda k: (0, 0)),
        scratch_shapes=[pltpu.VMEM((M, 1), jnp.float32)],
        compiler_params=pltpu.CompilerParams(
            dimension_semantics=("arbitrary",),         # K is a reduction axis
            vmem_limit_bytes=_VMEM_LIMIT),
    )(x, w_row, b)


# ----------------------------------------------------------------------------
# im2col glue (NHWC, bf16, reduction ordered (kh, kw, C)); Conv2d(k=4,s=2,p=1)
# ----------------------------------------------------------------------------
def im2col_nhwc(x, k=4, s=2, p=1):
    n, h, w, c = x.shape
    oh = (h + 2 * p - k) // s + 1
    ow = (w + 2 * p - k) // s + 1
    xp = jnp.pad(x, ((0, 0), (p, p), (p, p), (0, 0)))
    cols = []
    for kh in range(k):
        for kw in range(k):
            cols.append(xp[:, kh:kh + s * oh:s, kw:kw + s * ow:s, :])  # [N,OH,OW,C]
    cols = jnp.stack(cols, axis=3)                    # [N, OH, OW, k*k, C]
    return cols.reshape(n * oh * ow, k * k * c), oh, ow


def conv_relu_nhwc(x, w_packed, b_packed):
    """Conv2d(k=4,s=2,p=1)+ReLU on bf16 NHWC input with pre-packed [k*k*C, OC] bf16 weight."""
    n = x.shape[0]
    oc = w_packed.shape[1]
    cols, oh, ow = im2col_nhwc(x)                                  # bf16 patches
    out = matmul_bias_act(cols, w_packed, b_packed, "relu")        # bf16 [N*OH*OW, OC]
    return out.reshape(n, oh, ow, oc)                              # stays NHWC


# ----------------------------------------------------------------------------
# Parameters: PyTorch-layout init + one-time packing to kernel layout (bf16)
# ----------------------------------------------------------------------------
def init_params(img_size, key):
    ks = jax.random.split(key, 8)
    flat = 256 * (img_size // 8) * (img_size // 8)
    scale = 0.05
    return {
        "w1": scale * jax.random.normal(ks[0], (64, 3, 4, 4), jnp.float32),
        "b1": scale * jax.random.normal(ks[1], (64,), jnp.float32),
        "w2": scale * jax.random.normal(ks[2], (128, 64, 4, 4), jnp.float32),
        "b2": scale * jax.random.normal(ks[3], (128,), jnp.float32),
        "w3": scale * jax.random.normal(ks[4], (256, 128, 4, 4), jnp.float32),
        "b3": scale * jax.random.normal(ks[5], (256,), jnp.float32),
        "wl": scale * jax.random.normal(ks[6], (flat, 1), jnp.float32),
        "bl": scale * jax.random.normal(ks[7], (1,), jnp.float32),
    }


def pack_params(p, img_size):
    """One-time repack of PyTorch-layout params into the kernel layout (bf16 weights)."""
    def pack_conv(w, b, pad_in_to=None):
        oc, ic = w.shape[0], w.shape[1]
        # OIHW -> [kh, kw, IC, OC] -> [kh*kw*IC, OC]  (matches im2col column order)
        wm = jnp.transpose(w, (2, 3, 1, 0))
        if pad_in_to is not None and pad_in_to > ic:
            wm = jnp.pad(wm, ((0, 0), (0, 0), (0, pad_in_to - ic), (0, 0)))
        wm = wm.reshape(-1, oc).astype(jnp.bfloat16)
        return wm, b.reshape(1, oc).astype(jnp.float32)

    s = img_size // 8
    # PyTorch flattens NCHW as (C, H, W); our flatten is (H, W, C) -> permute rows once.
    wl_hwc = p["wl"].reshape(256, s, s, 1).transpose(1, 2, 0, 3).reshape(256 * s * s, 1)
    w1, b1 = pack_conv(p["w1"], p["b1"], pad_in_to=_IN_CH_PAD)
    w2, b2 = pack_conv(p["w2"], p["b2"])
    w3, b3 = pack_conv(p["w3"], p["b3"])
    return {
        "w1": w1, "b1": b1,
        "w2": w2, "b2": b2,
        "w3": w3, "b3": b3,
        "wl_row": wl_hwc.T.astype(jnp.bfloat16),   # [1, flat] for the reduction kernel
        "bl": p["bl"].reshape(1, 1).astype(jnp.float32),
    }


# ----------------------------------------------------------------------------
# Forward (jit'ed; NCHW at the module boundary, bf16 NHWC internally)
# ----------------------------------------------------------------------------
@jax.jit
def risk_detection_forward(x_nchw, packed):
    x = jnp.transpose(x_nchw, (0, 2, 3, 1))                         # NCHW -> NHWC once
    x = jnp.pad(x, ((0, 0), (0, 0), (0, 0), (0, _IN_CH_PAD - _IN_CH)))  # C: 3 -> 8
    x = x.astype(jnp.bfloat16)                                      # bf16 end-to-end
    h = conv_relu_nhwc(x, packed["w1"], packed["b1"])               # [N, IMG/2, IMG/2,  64]
    h = conv_relu_nhwc(h, packed["w2"], packed["b2"])               # [N, IMG/4, IMG/4, 128]
    h = conv_relu_nhwc(h, packed["w3"], packed["b3"])               # [N, IMG/8, IMG/8, 256]
    flat = h.reshape(h.shape[0], -1)                                # (H, W, C) flatten order
    return linear_sigmoid(flat, packed["wl_row"], packed["bl"])     # [N, 1] f32


# ----------------------------------------------------------------------------
# Pure-JAX f32 reference (uses the original PyTorch-layout params)
# ----------------------------------------------------------------------------
def _reference_forward(x, params):
    def conv(x, w, b):
        y = jax.lax.conv_general_dilated(
            x, w, window_strides=(2, 2), padding=((1, 1), (1, 1)),
            dimension_numbers=("NCHW", "OIHW", "NCHW"))
        return jax.nn.relu(y + b[None, :, None, None])

    h = conv(x, params["w1"], params["b1"])
    h = conv(h, params["w2"], params["b2"])
    h = conv(h, params["w3"], params["b3"])
    flat = h.reshape(h.shape[0], -1)
    return jax.nn.sigmoid(flat @ params["wl"] + params["bl"])


if __name__ == "__main__":
    IMG_SIZE = 16
    BATCH = 2

    key = jax.random.PRNGKey(0)
    k_x, k_p = jax.random.split(key)
    x = jax.random.normal(k_x, (BATCH, 3, IMG_SIZE, IMG_SIZE), jnp.float32)
    params = init_params(IMG_SIZE, k_p)
    packed = pack_params(params, IMG_SIZE)          # one-time bf16 repack (outside jit)

    out = jax.block_until_ready(risk_detection_forward(x, packed))
    ref = jax.block_until_ready(_reference_forward(x, params))

    assert out.shape == (BATCH, 1), out.shape
    # bf16 activations/weights vs. f32 reference: 1e-2 is comfortably loose here, but
    # note for the risk-threshold use case that scores can shift by ~1e-3.
    assert jnp.allclose(out, ref, rtol=1e-2, atol=1e-2), (out, ref)
    print("KERNEL_OK")
</pallas_src>

<mosaic_0001>
module attributes {stable_mosaic.version = 11 : i64} {
  func.func @_matmul_bias_act_kernel(%arg0: i32, %arg1: memref<64x128xbf16, #tpu.memory_space<vmem>>, %arg2: memref<128x64xbf16, #tpu.memory_space<vmem>>, %arg3: memref<1x64xf32, #tpu.memory_space<vmem>>, %arg4: memref<64x64xbf16, #tpu.memory_space<vmem>>) attributes {dimension_semantics = [#tpu.dimension_semantics<parallel>], iteration_bounds = array<i64: 2>, scalar_prefetch = 0 : i64, scratch_operands = 0 : i64, tpu.core_type = #tpu.core_type<tc>, window_params = [{transform_indices = @transform_0, window_bounds = array<i64: 64, 128>}, {pipeline_mode = #tpu.pipeline_mode<synchronous>, transform_indices = @transform_1, window_bounds = array<i64: 128, 64>}, {pipeline_mode = #tpu.pipeline_mode<synchronous>, transform_indices = @transform_2, window_bounds = array<i64: 1, 64>}, {transform_indices = @transform_3, window_bounds = array<i64: 64, 64>}]} {
    %c0 = arith.constant 0 : index
    %c0_0 = arith.constant 0 : index
    %0 = vector.load %arg1[%c0, %c0_0] : memref<64x128xbf16, #tpu.memory_space<vmem>>, vector<64x128xbf16>
    %c0_1 = arith.constant 0 : index
    %c0_2 = arith.constant 0 : index
    %1 = vector.load %arg2[%c0_1, %c0_2] : memref<128x64xbf16, #tpu.memory_space<vmem>>, vector<128x64xbf16>
    %cst = arith.constant dense<0.000000e+00> : vector<64x64xf32>
    %2 = tpu.matmul %0, %1, %cst {dimension_numbers = #tpu.dot_dimension_numbers<[1], [0], [0], [1], [0, 0, 1, 1], [], []>} : vector<64x128xbf16>, vector<128x64xbf16>, vector<64x64xf32> -> vector<64x64xf32>
    %c0_3 = arith.constant 0 : index
    %c0_4 = arith.constant 0 : index
    %3 = vector.load %arg3[%c0_3, %c0_4] : memref<1x64xf32, #tpu.memory_space<vmem>>, vector<1x64xf32>
    %4 = vector.broadcast %3 : vector<1x64xf32> to vector<64x64xf32>
    %5 = arith.addf %2, %4 : vector<64x64xf32>
    %cst_5 = arith.constant 0.000000e+00 : f32
    %6 = vector.broadcast %cst_5 : f32 to vector<64x64xf32>
    %7 = arith.maximumf %5, %6 : vector<64x64xf32>
    %8 = arith.truncf %7 : vector<64x64xf32> to vector<64x64xbf16>
    %c0_6 = arith.constant 0 : index
    %c0_7 = arith.constant 0 : index
    %9 = vector.load %arg4[%c0_6, %c0_7] : memref<64x64xbf16, #tpu.memory_space<vmem>>, vector<64x64xbf16>
    tpu.vector_store %arg4[%c0_6, %c0_7], %8 {strides = array<i32>} : memref<64x64xbf16, #tpu.memory_space<vmem>>, vector<64x64xbf16>,
    return
  }
  func.func @transform_0(%arg0: i32) -> (i32, i32) {
    %c0_i32 = arith.constant 0 : i32
    %c0_i32_0 = arith.constant 0 : i32
    return %arg0, %c0_i32 : i32, i32
  }
  func.func @transform_1(%arg0: i32) -> (i32, i32) {
    %c0_i32 = arith.constant 0 : i32
    %c0_i32_0 = arith.constant 0 : i32
    %c0_i32_1 = arith.constant 0 : i32
    return %c0_i32, %c0_i32_0 : i32, i32
  }
  func.func @transform_2(%arg0: i32) -> (i32, i32) {
    %c0_i32 = arith.constant 0 : i32
    %c0_i32_0 = arith.constant 0 : i32
    %c0_i32_1 = arith.constant 0 : i32
    return %c0_i32, %c0_i32_0 : i32, i32
  }
  func.func @transform_3(%arg0: i32) -> (i32, i32) {
    %c0_i32 = arith.constant 0 : i32
    %c0_i32_0 = arith.constant 0 : i32
    return %arg0, %c0_i32 : i32, i32
  }
}

module attributes {stable_mosaic.version = 11 : i64} {
  func.func @_matmul_bias_act_kernel(%arg0: i32, %arg1: memref<16x1024xbf16, #tpu.memory_space<vmem>>, %arg2: memref<1024x128xbf16, #tpu.memory_space<vmem>>, %arg3: memref<1x128xf32, #tpu.memory_space<vmem>>, %arg4: memref<16x128xbf16, #tpu.memory_space<vmem>>) attributes {dimension_semantics = [#tpu.dimension_semantics<parallel>], iteration_bounds = array<i64: 2>, scalar_prefetch = 0 : i64, scratch_operands = 0 : i64, tpu.core_type = #tpu.core_type<tc>, window_params = [{transform_indices = @transform_0, window_bounds = array<i64: 16, 1024>}, {pipeline_mode = #tpu.pipeline_mode<synchronous>, transform_indices = @transform_1, window_bounds = array<i64: 1024, 128>}, {pipeline_mode = #tpu.pipeline_mode<synchronous>, transform_indices = @transform_2, window_bounds = array<i64: 1, 128>}, {transform_indices = @transform_3, window_bounds = array<i64: 16, 128>}]} {
    %c0 = arith.constant 0 : index
    %c0_0 = arith.constant 0 : index
    %0 = vector.load %arg1[%c0, %c0_0] : memref<16x1024xbf16, #tpu.memory_space<vmem>>, vector<16x1024xbf16>
    %c0_1 = arith.constant 0 : index
    %c0_2 = arith.constant 0 : index
    %1 = vector.load %arg2[%c0_1, %c0_2] : memref<1024x128xbf16, #tpu.memory_space<vmem>>, vector<1024x128xbf16>
    %cst = arith.constant dense<0.000000e+00> : vector<16x128xf32>
    %2 = tpu.matmul %0, %1, %cst {dimension_numbers = #tpu.dot_dimension_numbers<[1], [0], [0], [1], [0, 0, 1, 1], [], []>} : vector<16x1024xbf16>, vector<1024x128xbf16>, vector<16x128xf32> -> vector<16x128xf32>
    %c0_3 = arith.constant 0 : index
    %c0_4 = arith.constant 0 : index
    %3 = vector.load %arg3[%c0_3, %c0_4] : memref<1x128xf32, #tpu.memory_space<vmem>>, vector<1x128xf32>
    %4 = vector.broadcast %3 : vector<1x128xf32> to vector<16x128xf32>
    %5 = arith.addf %2, %4 : vector<16x128xf32>
    %cst_5 = arith.constant 0.000000e+00 : f32
    %6 = vector.broadcast %cst_5 : f32 to vector<16x128xf32>
    %7 = arith.maximumf %5, %6 : vector<16x128xf32>
    %8 = arith.truncf %7 : vector<16x128xf32> to vector<16x128xbf16>
    %c0_6 = arith.constant 0 : index
    %c0_7 = arith.constant 0 : index
    %9 = vector.load %arg4[%c0_6, %c0_7] : memref<16x128xbf16, #tpu.memory_space<vmem>>, vector<16x128xbf16>
    tpu.vector_store %arg4[%c0_6, %c0_7], %8 {strides = array<i32>} : memref<16x128xbf16, #tpu.memory_space<vmem>>, vector<16x128xbf16>,
    return
  }
  func.func @transform_0(%arg0: i32) -> (i32, i32) {
    %c0_i32 = arith.constant 0 : i32
    %c0_i32_0 = arith.constant 0 : i32
    return %arg0, %c0_i32 : i32, i32
  }
  func.func @transform_1(%arg0: i32) -> (i32, i32) {
    %c0_i32 = arith.constant 0 : i32
    %c0_i32_0 = arith.constant 0 : i32
    %c0_i32_1 = arith.constant 0 : i32
    return %c0_i32, %c0_i32_0 : i32, i32
  }
  func.func @transform_2(%arg0: i32) -> (i32, i32) {
    %c0_i32 = arith.constant 0 : i32
    %c0_i32_0 = arith.constant 0 : i32
    %c0_i32_1 = arith.constant 0 : i32
    return %c0_i32, %c0_i32_0 : i32, i32
  }
  func.func @transform_3(%arg0: i32) -> (i32, i32) {
    %c0_i32 = arith.constant 0 : i32
    %c0_i32_0 = arith.constant 0 : i32
    return %arg0, %c0_i32 : i32, i32
  }
}

module attributes {stable_mosaic.version = 11 : i64} {
  func.func @_linear_sigmoid_kernel(%arg0: i32, %arg1: memref<2x1024xbf16, #tpu.memory_space<vmem>>, %arg2: memref<1x1024xbf16, #tpu.memory_space<vmem>>, %arg3: memref<1x1xf32, #tpu.memory_space<vmem>>, %arg4: memref<2x1xf32, #tpu.memory_space<vmem>>, %arg5: memref<2x1xf32, #tpu.memory_space<vmem>>) attributes {dimension_semantics = [#tpu.dimension_semantics<arbitrary>], iteration_bounds = array<i64: 1>, scalar_prefetch = 0 : i64, scratch_operands = 1 : i64, tpu.core_type = #tpu.core_type<tc>, window_params = [{transform_indices = @transform_0, window_bounds = array<i64: 2, 1024>}, {transform_indices = @transform_1, window_bounds = array<i64: 1, 1024>}, {pipeline_mode = #tpu.pipeline_mode<synchronous>, transform_indices = @transform_2, window_bounds = array<i64: 1, 1>}, {pipeline_mode = #tpu.pipeline_mode<synchronous>, transform_indices = @transform_3, window_bounds = array<i64: 2, 1>}]} {
    %c0_i32 = arith.constant 0 : i32
    %0 = arith.cmpi eq, %arg0, %c0_i32 : i32
    %1 = arith.extui %0 : i1 to i32
    %c0_i32_0 = arith.constant 0 : i32
    %2 = arith.cmpi ne, %1, %c0_i32_0 : i32
    scf.if %2 {
      %cst_10 = arith.constant 0.000000e+00 : f32
      %17 = vector.broadcast %cst_10 : f32 to vector<2x1xf32>
      %c0_11 = arith.constant 0 : index
      %c0_12 = arith.constant 0 : index
      %18 = vector.load %arg5[%c0_11, %c0_12] : memref<2x1xf32, #tpu.memory_space<vmem>>, vector<2x1xf32>
      tpu.vector_store %arg5[%c0_11, %c0_12], %17 {strides = array<i32>} : memref<2x1xf32, #tpu.memory_space<vmem>>, vector<2x1xf32>,
    } else {
    }
    %c0 = arith.constant 0 : index
    %c0_1 = arith.constant 0 : index
    %3 = vector.load %arg1[%c0, %c0_1] : memref<2x1024xbf16, #tpu.memory_space<vmem>>, vector<2x1024xbf16>
    %4 = arith.extf %3 : vector<2x1024xbf16> to vector<2x1024xf32>
    %c0_2 = arith.constant 0 : index
    %c0_3 = arith.constant 0 : index
    %5 = vector.load %arg2[%c0_2, %c0_3] : memref<1x1024xbf16, #tpu.memory_space<vmem>>, vector<1x1024xbf16>
    %6 = arith.extf %5 : vector<1x1024xbf16> to vector<1x1024xf32>
    %7 = vector.broadcast %6 : vector<1x1024xf32> to vector<2x1024xf32>
    %8 = arith.mulf %4, %7 : vector<2x1024xf32>
    %c0_4 = arith.constant 0 : index
    %c0_5 = arith.constant 0 : index
    %9 = vector.load %arg5[%c0_4, %c0_5] : memref<2x1xf32, #tpu.memory_space<vmem>>, vector<2x1xf32>
    %cst = arith.constant dense<0.000000e+00> : vector<2xf32>
    %10 = vector.multi_reduction <add>, %8, %cst [1] : vector<2x1024xf32> to vector<2xf32>
    %11 = vector.shape_cast %10 : vector<2xf32> to vector<2x1xf32>
    %12 = arith.addf %9, %11 : vector<2x1xf32>
    %c0_6 = arith.constant 0 : index
    %c0_7 = arith.constant 0 : index
    %13 = vector.load %arg5[%c0_6, %c0_7] : memref<2x1xf32, #tpu.memory_space<vmem>>, vector<2x1xf32>
    tpu.vector_store %arg5[%c0_6, %c0_7], %12 {strides = array<i32>} : memref<2x1xf32, #tpu.memory_space<vmem>>, vector<2x1xf32>,
    %c0_i32_8 = arith.constant 0 : i32
    %14 = arith.cmpi eq, %arg0, %c0_i32_8 : i32
    %15 = arith.extui %14 : i1 to i32
    %c0_i32_9 = arith.constant 0 : i32
    %16 = arith.cmpi ne, %15, %c0_i32_9 : i32
    scf.if %16 {
      %c0_10 = arith.constant 0 : index
      %c0_11 = arith.constant 0 : index
      %17 = vector.load %arg5[%c0_10, %c0_11] : memref<2x1xf32, #tpu.memory_space<vmem>>, vector<2x1xf32>
      %c0_12 = arith.constant 0 : index
      %c0_13 = arith.constant 0 : index
      %18 = vector.load %arg3[%c0_12, %c0_13] : memref<1x1xf32, #tpu.memory_space<vmem>>, vector<1x1xf32>
      %19 = vector.broadcast %18 : vector<1x1xf32> to vector<2x1xf32>
      %20 = arith.addf %17, %19 : vector<2x1xf32>
      %21 = arith.negf %20 : vector<2x1xf32>
      %22 = math.exp %21 : vector<2x1xf32>
      %cst_14 = arith.constant 1.000000e+00 : f32
      %23 = vector.broadcast %cst_14 : f32 to vector<2x1xf32>
      %24 = arith.addf %23, %22 : vector<2x1xf32>
      %25 = arith.divf %23, %24 : vector<2x1xf32>
      %c0_15 = arith.constant 0 : index
      %c0_16 = arith.constant 0 : index
      %26 = vector.load %arg4[%c0_15, %c0_16] : memref<2x1xf32, #tpu.memory_space<vmem>>, vector<2x1xf32>
      tpu.vector_store %arg4[%c0_15, %c0_16], %25 {strides = array<i32>} : memref<2x1xf32, #tpu.memory_space<vmem>>, vector<2x1xf32>,
    } else {
    }
    return
  }
  func.func @transform_0(%arg0: i32) -> (i32, i32) {
    %c0_i32 = arith.constant 0 : i32
    %c0_i32_0 = arith.constant 0 : i32
    return %c0_i32, %arg0 : i32, i32
  }
  func.func @transform_1(%arg0: i32) -> (i32, i32) {
    %c0_i32 = arith.constant 0 : i32
    %c0_i32_0 = arith.constant 0 : i32
    return %c0_i32, %arg0 : i32, i32
  }
  func.func @transform_2(%arg0: i32) -> (i32, i32) {
    %c0_i32 = arith.constant 0 : i32
    %c0_i32_0 = arith.constant 0 : i32
    %c0_i32_1 = arith.constant 0 : i32
    return %c0_i32, %c0_i32_0 : i32, i32
  }
  func.func @transform_3(%arg0: i32) -> (i32, i32) {
    %c0_i32 = arith.constant 0 : i32
    %c0_i32_0 = arith.constant 0 : i32
    %c0_i32_1 = arith.constant 0 : i32
    return %c0_i32, %c0_i32_0 : i32, i32
  }
}

module attributes {stable_mosaic.version = 11 : i64} {
  func.func @_matmul_bias_act_kernel(%arg0: i32, %arg1: memref<8x2048xbf16, #tpu.memory_space<vmem>>, %arg2: memref<2048x256xbf16, #tpu.memory_space<vmem>>, %arg3: memref<1x256xf32, #tpu.memory_space<vmem>>, %arg4: memref<8x256xbf16, #tpu.memory_space<vmem>>) attributes {dimension_semantics = [#tpu.dimension_semantics<parallel>], iteration_bounds = array<i64: 1>, scalar_prefetch = 0 : i64, scratch_operands = 0 : i64, tpu.core_type = #tpu.core_type<tc>, window_params = [{transform_indices = @transform_0, window_bounds = array<i64: 8, 2048>}, {pipeline_mode = #tpu.pipeline_mode<synchronous>, transform_indices = @transform_1, window_bounds = array<i64: 2048, 256>}, {pipeline_mode = #tpu.pipeline_mode<synchronous>, transform_indices = @transform_2, window_bounds = array<i64: 1, 256>}, {transform_indices = @transform_3, window_bounds = array<i64: 8, 256>}]} {
    %c0 = arith.constant 0 : index
    %c0_0 = arith.constant 0 : index
    %0 = vector.load %arg1[%c0, %c0_0] : memref<8x2048xbf16, #tpu.memory_space<vmem>>, vector<8x2048xbf16>
    %c0_1 = arith.constant 0 : index
    %c0_2 = arith.constant 0 : index
    %1 = vector.load %arg2[%c0_1, %c0_2] : memref<2048x256xbf16, #tpu.memory_space<vmem>>, vector<2048x256xbf16>
    %cst = arith.constant dense<0.000000e+00> : vector<8x256xf32>
    %2 = tpu.matmul %0, %1, %cst {dimension_numbers = #tpu.dot_dimension_numbers<[1], [0], [0], [1], [0, 0, 1, 1], [], []>} : vector<8x2048xbf16>, vector<2048x256xbf16>, vector<8x256xf32> -> vector<8x256xf32>
    %c0_3 = arith.constant 0 : index
    %c0_4 = arith.constant 0 : index
    %3 = vector.load %arg3[%c0_3, %c0_4] : memref<1x256xf32, #tpu.memory_space<vmem>>, vector<1x256xf32>
    %4 = vector.broadcast %3 : vector<1x256xf32> to vector<8x256xf32>
    %5 = arith.addf %2, %4 : vector<8x256xf32>
    %cst_5 = arith.constant 0.000000e+00 : f32
    %6 = vector.broadcast %cst_5 : f32 to vector<8x256xf32>
    %7 = arith.maximumf %5, %6 : vector<8x256xf32>
    %8 = arith.truncf %7 : vector<8x256xf32> to vector<8x256xbf16>
    %c0_6 = arith.constant 0 : index
    %c0_7 = arith.constant 0 : index
    %9 = vector.load %arg4[%c0_6, %c0_7] : memref<8x256xbf16, #tpu.memory_space<vmem>>, vector<8x256xbf16>
    tpu.vector_store %arg4[%c0_6, %c0_7], %8 {strides = array<i32>} : memref<8x256xbf16, #tpu.memory_space<vmem>>, vector<8x256xbf16>,
    return
  }
  func.func @transform_0(%arg0: i32) -> (i32, i32) {
    %c0_i32 = arith.constant 0 : i32
    %c0_i32_0 = arith.constant 0 : i32
    return %arg0, %c0_i32 : i32, i32
  }
  func.func @transform_1(%arg0: i32) -> (i32, i32) {
    %c0_i32 = arith.constant 0 : i32
    %c0_i32_0 = arith.constant 0 : i32
    %c0_i32_1 = arith.constant 0 : i32
    return %c0_i32, %c0_i32_0 : i32, i32
  }
  func.func @transform_2(%arg0: i32) -> (i32, i32) {
    %c0_i32 = arith.constant 0 : i32
    %c0_i32_0 = arith.constant 0 : i32
    %c0_i32_1 = arith.constant 0 : i32
    return %c0_i32, %c0_i32_0 : i32, i32
  }
  func.func @transform_3(%arg0: i32) -> (i32, i32) {
    %c0_i32 = arith.constant 0 : i32
    %c0_i32_0 = arith.constant 0 : i32
    return %arg0, %c0_i32 : i32, i32
  }
}

</mosaic_0001>

<llo_original>
// kernel: risk_detection_forward.4
$region0: #{risk_detection_forward.4}
  #allocation0 [shape = 'u32[]', space=smem, size = 0x4, offset = 0x4, fixed_abs, tag = 'smem constant byte address 0x4 - core index']
  #allocation1 [shape = 'u32[72,128]{1,0:T(1,128)}', space=vmem, size = 0x9000, scoped, tag = 'internal scratch']
  %s0 = inlined_call_operand.vmem [shape: bf16[128,128], index: 0, kind: input, shape index: {}]
  %s1 = inlined_call_operand.vmem [shape: bf16[128,64], index: 1, kind: input, shape index: {}]
  %s2 = inlined_call_operand.vmem [shape: f32[1,64], index: 2, kind: input, shape index: {}]
  %s3 = inlined_call_operand.vmem [shape: bf16[128,64], index: 3, kind: output, shape index: {}]
  %s4 = sld [smem:[#allocation0]]
  $region45: #{risk_detection_forward.4} parent=0
    _
  %s6 = ssub.s32 1, %s4
  %s7 = scalar_select 0, %s6, %s4
  loop: start=0, step=1, limit=4
  $region2: #{risk_detection_forward.4} parent=0 // loop_pre_header
    _
  $region3: #{risk_detection_forward.4} parent=0 // loop_header
    %s9 = sphi 0, %s13
    %p10 = scmp.ge.s32.totalorder %s9, 4
    %s19 = sphi 0, %s21
    %s22 = sphi 0, %s19
    %s23 = sphi 0, %s22
    %s39 = sphi 0, %s23
    %s43 = sphi 0, %s43
    %s45 = sphi 0, %s43
    %s46 = sphi 0, %s45
    %s60 = sphi 0, %s46
    %s64 = sphi 0, %s64
    %s66 = sphi 0, %s64
    %s67 = sphi 0, %s66
    %s81 = sphi 0, %s67
    %s87 = sphi 0, %s89
    %s90 = sphi 0, %s87
    %s91 = sphi 0, %s90
    %s107 = sphi 0, %s91
  $region4: #{risk_detection_forward.4} parent=0 // loop_header_branch
    %12 = sbr.rel (%p10) target = $region8
  $region5: #{risk_detection_forward.4} parent=0 // loop_body
    %s14 = ssub.s32 %s9, 1
    %s15 = ssub.s32 %s9, 2
    %s16 = sadd.s32 %s9, 1
    %s17 = ssub.s32 %s9, %s16
    %p18 = scmp.eq.s32.totalorder %s17, 0
    %s20 = sadd.s32 %s19, 1
    %s21 = scalar_select %p18, %s19, %s20
    %p24 = pneg %p18
    %p25 = scmp.eq.s32.totalorder %s9, 1
    %p26 = por %p24, %p25
    %p27 = scmp.ne.s32.totalorder %s19, %s22
    %p28 = scmp.eq.s32.totalorder %s9, 0
    %p29 = por %p27, %p28
    %p30 = scmp.ne.s32.totalorder %s19, %s22
    %p31 = scmp.eq.s32.totalorder %s14, 1
    %p32 = por %p30, %p31
    %p33 = scmp.ne.s32.totalorder %s22, %s23
    %p34 = scmp.eq.s32.totalorder %s14, 0
    %p35 = por %p33, %p34
    %p36 = scmp.ne.s32.totalorder %s22, %s23
    %p37 = scmp.eq.s32.totalorder %s15, 1
    %p38 = por %p36, %p37
    %p40 = scmp.ne.s32.totalorder %s23, %s39
    %p41 = scmp.eq.s32.totalorder %s15, 0
    %p42 = por %p40, %p41
    %s44 = sadd.s32 %s43, 1
    %p47 = scmp.eq.s32.totalorder %s9, 1
    %p48 = scmp.ne.s32.totalorder %s43, %s45
    %p49 = scmp.eq.s32.totalorder %s9, 0
    %p50 = por %p48, %p49
    %p51 = scmp.ne.s32.totalorder %s43, %s45
    %p52 = scmp.eq.s32.totalorder %s14, 1
    %p53 = por %p51, %p52
    %p54 = scmp.ne.s32.totalorder %s45, %s46
    %p55 = scmp.eq.s32.totalorder %s14, 0
    %p56 = por %p54, %p55
    %p57 = scmp.ne.s32.totalorder %s45, %s46
    %p58 = scmp.eq.s32.totalorder %s15, 1
    %p59 = por %p57, %p58
    %p61 = scmp.ne.s32.totalorder %s46, %s60
    %p62 = scmp.eq.s32.totalorder %s15, 0
    %p63 = por %p61, %p62
    %s65 = sadd.s32 %s64, 1
    %p68 = scmp.eq.s32.totalorder %s9, 1
    %p69 = scmp.ne.s32.totalorder %s64, %s66
    %p70 = scmp.eq.s32.totalorder %s9, 0
    %p71 = por %p69, %p70
    %p72 = scmp.ne.s32.totalorder %s64, %s66
    %p73 = scmp.eq.s32.totalorder %s14, 1
    %p74 = por %p72, %p73
    %p75 = scmp.ne.s32.totalorder %s66, %s67
    %p76 = scmp.eq.s32.totalorder %s14, 0
    %p77 = por %p75, %p76
    %p78 = scmp.ne.s32.totalorder %s66, %s67
    %p79 = scmp.eq.s32.totalorder %s15, 1
    %p80 = por %p78, %p79
    %p82 = scmp.ne.s32.totalorder %s67, %s81
    %p83 = scmp.eq.s32.totalorder %s15, 0
    %p84 = por %p82, %p83
    %s85 = ssub.s32 %s9, %s16
    %p86 = scmp.eq.s32.totalorder %s85, 0
    %s88 = sadd.s32 %s87, 1
    %s89 = scalar_select %p86, %s87, %s88
    %p92 = pneg %p86
    %p93 = scmp.eq.s32.totalorder %s9, 1
    %p94 = por %p92, %p93
    %p95 = scmp.ne.s32.totalorder %s87, %s90
    %p96 = scmp.eq.s32.totalorder %s9, 0
    %p97 = por %p95, %p96
    %p98 = scmp.ne.s32.totalorder %s87, %s90
    %p99 = scmp.eq.s32.totalorder %s14, 1
    %p100 = por %p98, %p99
    %p101 = scmp.ne.s32.totalorder %s90, %s91
    %p102 = scmp.eq.s32.totalorder %s14, 0
    %p103 = por %p101, %p102
    %p104 = scmp.ne.s32.totalorder %s90, %s91
    %p105 = scmp.eq.s32.totalorder %s15, 1
    %p106 = por %p104, %p105
    %p108 = scmp.ne.s32.totalorder %s91, %s107
    %p109 = scmp.eq.s32.totalorder %s15, 0
    %p110 = por %p108, %p109
    %p111 = scmp.le.s32.totalorder 1, %s9
    %p112 = scmp.lt.s32.totalorder %s9, 3
    %p113 = pnand %p111, %p112
    %p114 = pneg %p113
    // Predicated region
    $region9: #{risk_detection_forward.4} parent=5 // pred_check
      _
    $region10: #{risk_detection_forward.4} parent=5 // pred_check_branch
      %116 = sbr.rel (%p113) target = $region12
    $region11: #{risk_detection_forward.4} parent=5 // pred_region
      %s117 = ssub.s32 %s9, 1
      // Predicated region
      $region13: #{risk_detection_forward.4} parent=11 // pred_check
        %p118 = pneg %p56
      $region14: #{risk_detection_forward.4} parent=11 // pred_check_branch
        %120 = sbr.rel (%p118) target = $region16
      $region15: #{risk_detection_forward.4} parent=11 // pred_region
        _
      $region16: #{risk_detection_forward.4} parent=11 // pred_fallthru
        _
      // Predicated region
      $region17: #{risk_detection_forward.4} parent=11 // pred_check
        %p121 = pneg %p77
      $region18: #{risk_detection_forward.4} parent=11 // pred_check_branch
        %123 = sbr.rel (%p121) target = $region20
      $region19: #{risk_detection_forward.4} parent=11 // pred_region
        _
      $region20: #{risk_detection_forward.4} parent=11 // pred_fallthru
        _
    $region12: #{risk_detection_forward.4} parent=5 // pred_fallthru
      _
    %p124 = scmp.lt.s32.totalorder %s9, 2
    // Predicated region
    $region21: #{risk_detection_forward.4} parent=5 // pred_check
      %p125 = pneg %p124
    $region22: #{risk_detection_forward.4} parent=5 // pred_check_branch
      %127 = sbr.rel (%p125) target = $region24
    $region23: #{risk_detection_forward.4} parent=5 // pred_region
      // Predicated region
      $region25: #{risk_detection_forward.4} parent=23 // pred_check
        %p128 = pneg %p29
      $region26: #{risk_detection_forward.4} parent=23 // pred_check_branch
        %130 = sbr.rel (%p128) target = $region28
      $region27: #{risk_detection_forward.4} parent=23 // pred_region
        %s131 = smul.u32 8, %s9
        %p132 = scmp.lt.s32.totalorder %s131, 15
        %s133 = scalar_select %p132, %s131, 15
        %s134 = smul.addr %s133, 4
        %s135 = scalar_lea.vmem %s0, %s134
        %s136 = smul.u32 8, %s9
      $region28: #{risk_detection_forward.4} parent=23 // pred_fallthru
        _
    $region24: #{risk_detection_forward.4} parent=5 // pred_fallthru
      _
    %p137 = scmp.le.s32.totalorder 1, %s9
    %p138 = scmp.lt.s32.totalorder %s9, 3
    %p139 = pnand %p137, %p138
    %p140 = pneg %p139
    // Predicated region
    $region29: #{risk_detection_forward.4} parent=5 // pred_check
      _
    $region30: #{risk_detection_forward.4} parent=5 // pred_check_branch
      %142 = sbr.rel (%p139) target = $region32
    $region31: #{risk_detection_forward.4} parent=5 // pred_region
      %s143 = ssub.s32 %s9, 1
      %s144 = smul.u32 8, %s14
      %p145 = scmp.lt.s32.totalorder %s144, 15
      %s146 = scalar_select %p145, %s144, 15
      %s147 = smul.addr %s146, 4
      %s148 = scalar_lea.vmem %s0, %s147
      %p149 = pneg %p35
      %p150 = pneg %p32
      %p151 = pneg %p56
      %p152 = pneg %p53
      %p153 = pneg %p77
      %p154 = pneg %p74
      %p155 = pneg %p103
      %p156 = pneg %p100
      %s157 = smul.u32 8, %s14
      %p158 = scmp.lt.s32.totalorder %s157, 15
      %s159 = scalar_select %p158, %s157, 15
      %s160 = smul.addr %s159, 4
      %s161 = scalar_lea.vmem %s3, %s160
      %s162 = smul.u32 8, %s14
      %p163 = scmp.lt.s32.totalorder %s162, 15
      %s164 = scalar_select %p163, %s162, 15
      %s165 = smul.addr %s164, 4
      %s166 = scalar_lea.vmem %s0, %s165
      %s167 = smul.u32 8, %s14
      %s168 = smul.u32 8, %s14
      %p169 = scmp.lt.s32.totalorder %s168, 15
      %s170 = scalar_select %p169, %s168, 15
      %s171 = smul.addr %s170, 4
      %s172 = scalar_lea.vmem %s3, %s171
      %s173 = smul.u32 8, %s14
      %v174 = vld [vmem:[%s166] sm:$0xf]
      %v175 = vld [vmem:[%s166 + $0x4] sm:$0xf]
      %v176 = vld [vmem:[%s166 + $0x8] sm:$0xf]
      %v177 = vld [vmem:[%s166 + $0xc] sm:$0xf]
      %v178 = vld [vmem:[%s166 + $0x10] sm:$0xf]
      %v179 = vld [vmem:[%s166 + $0x14] sm:$0xf]
      %v180 = vld [vmem:[%s166 + $0x18] sm:$0xf]
      %v181 = vld [vmem:[%s166 + $0x1c] sm:$0xf]
      %v182 = vld [vmem:[%s1] sm:$0xf]
      %v183 = vld [vmem:[%s1 + $0x4] sm:$0xf]
      %v184 = vld [vmem:[%s1 + $0x8] sm:$0xf]
      %v185 = vld [vmem:[%s1 + $0xc] sm:$0xf]
      %v186 = vld [vmem:[%s1 + $0x10] sm:$0xf]
      %v187 = vld [vmem:[%s1 + $0x14] sm:$0xf]
      %v188 = vld [vmem:[%s1 + $0x18] sm:$0xf]
      %v189 = vld [vmem:[%s1 + $0x1c] sm:$0xf]
      %v190 = vld [vmem:[%s1 + $0x20] sm:$0xf]
      %v191 = vld [vmem:[%s1 + $0x24] sm:$0xf]
      %v192 = vld [vmem:[%s1 + $0x28] sm:$0xf]
      %v193 = vld [vmem:[%s1 + $0x2c] sm:$0xf]
      %v194 = vld [vmem:[%s1 + $0x30] sm:$0xf]
      %v195 = vld [vmem:[%s1 + $0x34] sm:$0xf]
      %v196 = vld [vmem:[%s1 + $0x38] sm:$0xf]
      %v197 = vld [vmem:[%s1 + $0x3c] sm:$0xf]
      %v198 = vld [vmem:[%s2] sm:$0x1]
      %v200 = vperm.slane %v198, 0
      %v210 = vunpack.c.l.b16 %v174
      %v211 = vunpack.c.l.b16 %v175
      %v212 = vunpack.c.l.b16 %v176
      %v213 = vunpack.c.l.b16 %v177
      %v214 = vunpack.c.l.b16 %v178
      %v215 = vunpack.c.l.b16 %v179
      %v216 = vunpack.c.l.b16 %v180
      %v217 = vunpack.c.l.b16 %v181
      %v218 = vpack.c.b16 %v211, %v210
      %v219 = vpack.c.b16 %v213, %v212
      %v220 = vpack.c.b16 %v215, %v214
      %v221 = vpack.c.b16 %v217, %v216
      %v242 = vunpack.c.l.b16 %v182
      %v243 = vunpack.c.l.b16 %v183
      %v244 = vunpack.c.l.b16 %v184
      %v245 = vunpack.c.l.b16 %v185
      %v246 = vunpack.c.l.b16 %v186
      %v247 = vunpack.c.l.b16 %v187
      %v248 = vunpack.c.l.b16 %v188
      %v249 = vunpack.c.l.b16 %v189
      %v250 = vunpack.c.l.b16 %v190
      %v251 = vunpack.c.l.b16 %v191
      %v252 = vunpack.c.l.b16 %v192
      %v253 = vunpack.c.l.b16 %v193
      %v254 = vunpack.c.l.b16 %v194
      %v255 = vunpack.c.l.b16 %v195
      %v256 = vunpack.c.l.b16 %v196
      %v257 = vunpack.c.l.b16 %v197
      %v258 = vpack.c.b16 %v243, %v242
      %v259 = vpack.c.b16 %v245, %v244
      %v260 = vpack.c.b16 %v247, %v246
      %v261 = vpack.c.b16 %v249, %v248
      %v262 = vpack.c.b16 %v251, %v250
      %v263 = vpack.c.b16 %v253, %v252
      %v264 = vpack.c.b16 %v255, %v254
      %v265 = vpack.c.b16 %v257, %v256
      %274 = vmatpush.bf16.msra.mxu0 %v265
      %275 = vmatpush.bf16.msra.mxu0 %v264
      %276 = vmatpush.bf16.msra.mxu0 %v263
      %277 = vmatpush.bf16.msra.mxu0 %v262
      %278 = vmatpush.bf16.msra.mxu0 %v261
      %279 = vmatpush.bf16.msra.mxu0 %v260
      %280 = vmatpush.bf16.msra.mxu0 %v259
      %281 = vmatpush.bf16.msra.mxu0 %v258
      %282 = vmatmul.bf16.gmra.mxu0 %v218
      %v283 = vpop.f32.mrf.mxu0
      %v284 = vadd.f32 %v200, %v283
      %v285 = vpop.f32.mrf.mxu0
      %v286 = vadd.f32 %v200, %v285
      %287 = vmatmul.bf16.gmra.mxu0 %v219
      %v288 = vpop.f32.mrf.mxu0
      %v289 = vadd.f32 %v200, %v288
      %v290 = vpop.f32.mrf.mxu0
      %v291 = vadd.f32 %v200, %v290
      %292 = vmatmul.bf16.gmra.mxu0 %v220
      %v293 = vpop.f32.mrf.mxu0
      %v294 = vadd.f32 %v200, %v293
      %v295 = vpop.f32.mrf.mxu0
      %v296 = vadd.f32 %v200, %v295
      %297 = vmatmul.bf16.gmra.mxu0 %v221
      %v298 = vpop.f32.mrf.mxu0
      %v299 = vadd.f32 %v200, %v298
      %v300 = vpop.f32.mrf.mxu0
      %v301 = vadd.f32 %v200, %v300
      %302 = vdwg.mxu0
      %v303 = vmax.f32 %v284, 0.0
      %v304 = vmax.f32 %v286, 0.0
      %v305 = vmax.f32 %v289, 0.0
      %v306 = vmax.f32 %v291, 0.0
      %v307 = vmax.f32 %v294, 0.0
      %v308 = vmax.f32 %v296, 0.0
      %v309 = vmax.f32 %v299, 0.0
      %v310 = vmax.f32 %v301, 0.0
      %v311 = vpack.c.bf16 %v303, %v303
      %v312 = vpack.c.bf16 %v304, %v304
      %v313 = vpack.c.bf16 %v305, %v305
      %v314 = vpack.c.bf16 %v306, %v306
      %v315 = vpack.c.bf16 %v307, %v307
      %v316 = vpack.c.bf16 %v308, %v308
      %v317 = vpack.c.bf16 %v309, %v309
      %v318 = vpack.c.bf16 %v310, %v310
      %vm319 = vcmask 519168
      %320 = vst.msk [vmem:[%s172] sm:$0xf] %vm319, %v311
      %321 = vst.msk [vmem:[%s172 + $0x4] sm:$0xf] %vm319, %v312
      %322 = vst.msk [vmem:[%s172 + $0x8] sm:$0xf] %vm319, %v313
      %323 = vst.msk [vmem:[%s172 + $0xc] sm:$0xf] %vm319, %v314
      %324 = vst.msk [vmem:[%s172 + $0x10] sm:$0xf] %vm319, %v315
      %325 = vst.msk [vmem:[%s172 + $0x14] sm:$0xf] %vm319, %v316
      %326 = vst.msk [vmem:[%s172 + $0x18] sm:$0xf] %vm319, %v317
      %327 = vst.msk [vmem:[%s172 + $0x1c] sm:$0xf] %vm319, %v318
      %s328 = smul.u32 8, %s14
      %p329 = scmp.lt.s32.totalorder %s328, 15
      %s330 = scalar_select %p329, %s328, 15
      %s331 = smul.addr %s330, 4
      %s332 = scalar_lea.vmem %s3, %s331
      // Predicated region
      $region33: #{risk_detection_forward.4} parent=31 // pred_check
        %p333 = pneg %p100
      $region34: #{risk_detection_forward.4} parent=31 // pred_check_branch
        %335 = sbr.rel (%p333) target = $region36
      $region35: #{risk_detection_forward.4} parent=31 // pred_region
        %s336 = smul.u32 8, %s14
      $region36: #{risk_detection_forward.4} parent=31 // pred_fallthru
        _
    $region32: #{risk_detection_forward.4} parent=5 // pred_fallthru
      _
    %p337 = scmp.le.s32.totalorder 2, %s9
    // Predicated region
    $region37: #{risk_detection_forward.4} parent=5 // pred_check
      %p338 = pneg %p337
    $region38: #{risk_detection_forward.4} parent=5 // pred_check_branch
      %340 = sbr.rel (%p338) target = $region40
    $region39: #{risk_detection_forward.4} parent=5 // pred_region
      %s341 = ssub.s32 %s9, 2
      // Predicated region
      $region41: #{risk_detection_forward.4} parent=39 // pred_check
        %p342 = pneg %p106
      $region42: #{risk_detection_forward.4} parent=39 // pred_check_branch
        %344 = sbr.rel (%p342) target = $region44
      $region43: #{risk_detection_forward.4} parent=39 // pred_region
        %s345 = smul.u32 8, %s15
        %p346 = scmp.lt.s32.totalorder %s345, 15
        %s347 = scalar_select %p346, %s345, 15
        %s348 = smul.addr %s347, 4
        %s349 = scalar_lea.vmem %s3, %s348
      $region44: #{risk_detection_forward.4} parent=39 // pred_fallthru
        _
    $region40: #{risk_detection_forward.4} parent=5 // pred_fallthru
      _
  $region6: #{risk_detection_forward.4} parent=0 // loop_footer
    %s13 = sadd.s32 1, %s9
  $region7: #{risk_detection_forward.4} parent=0 // loop_footer_branch
    %8 = sbr.rel target = $region3
  $region8: #{risk_detection_forward.4} parent=0 // loop_exit
    _

// kernel: risk_detection_forward.5
$region0: #{risk_detection_forward.5}
  #allocation0 [shape = 'u32[]', space=smem, size = 0x4, offset = 0x4, fixed_abs, tag = 'smem constant byte address 0x4 - core index']
  #allocation1 [shape = 'u32[72,128]{1,0:T(1,128)}', space=vmem, size = 0x9000, scoped, tag = 'internal scratch']
  %s0 = inlined_call_operand.vmem [shape: bf16[32,1024], index: 0, kind: input, shape index: {}]
  %s1 = inlined_call_operand.vmem [shape: bf16[1024,128], index: 1, kind: input, shape index: {}]
  %s2 = inlined_call_operand.vmem [shape: f32[1,128], index: 2, kind: input, shape index: {}]
  %s3 = inlined_call_operand.vmem [shape: bf16[32,128], index: 3, kind: output, shape index: {}]
  %s4 = sld [smem:[#allocation0]]
  $region45: #{risk_detection_forward.5} parent=0
    _
  %s6 = ssub.s32 1, %s4
  %s7 = scalar_select 0, %s6, %s4
  loop: start=0, step=1, limit=4
  $region2: #{risk_detection_forward.5} parent=0 // loop_pre_header
    _
  $region3: #{risk_detection_forward.5} parent=0 // loop_header
    %s9 = sphi 0, %s13
    %p10 = scmp.ge.s32.totalorder %s9, 4
    %s19 = sphi 0, %s21
    %s22 = sphi 0, %s19
    %s23 = sphi 0, %s22
    %s39 = sphi 0, %s23
    %s43 = sphi 0, %s43
    %s45 = sphi 0, %s43
    %s46 = sphi 0, %s45
    %s60 = sphi 0, %s46
    %s64 = sphi 0, %s64
    %s66 = sphi 0, %s64
    %s67 = sphi 0, %s66
    %s81 = sphi 0, %s67
    %s87 = sphi 0, %s89
    %s90 = sphi 0, %s87
    %s91 = sphi 0, %s90
    %s107 = sphi 0, %s91
  $region4: #{risk_detection_forward.5} parent=0 // loop_header_branch
    %12 = sbr.rel (%p10) target = $region8
  $region5: #{risk_detection_forward.5} parent=0 // loop_body
    %s14 = ssub.s32 %s9, 1
    %s15 = ssub.s32 %s9, 2
    %s16 = sadd.s32 %s9, 1
    %s17 = ssub.s32 %s9, %s16
    %p18 = scmp.eq.s32.totalorder %s17, 0
    %s20 = sadd.s32 %s19, 1
    %s21 = scalar_select %p18, %s19, %s20
    %p24 = pneg %p18
    %p25 = scmp.eq.s32.totalorder %s9, 1
    %p26 = por %p24, %p25
    %p27 = scmp.ne.s32.totalorder %s19, %s22
    %p28 = scmp.eq.s32.totalorder %s9, 0
    %p29 = por %p27, %p28
    %p30 = scmp.ne.s32.totalorder %s19, %s22
    %p31 = scmp.eq.s32.totalorder %s14, 1
    %p32 = por %p30, %p31
    %p33 = scmp.ne.s32.totalorder %s22, %s23
    %p34 = scmp.eq.s32.totalorder %s14, 0
    %p35 = por %p33, %p34
    %p36 = scmp.ne.s32.totalorder %s22, %s23
    %p37 = scmp.eq.s32.totalorder %s15, 1
    %p38 = por %p36, %p37
    %p40 = scmp.ne.s32.totalorder %s23, %s39
    %p41 = scmp.eq.s32.totalorder %s15, 0
    %p42 = por %p40, %p41
    %s44 = sadd.s32 %s43, 1
    %p47 = scmp.eq.s32.totalorder %s9, 1
    %p48 = scmp.ne.s32.totalorder %s43, %s45
    %p49 = scmp.eq.s32.totalorder %s9, 0
    %p50 = por %p48, %p49
    %p51 = scmp.ne.s32.totalorder %s43, %s45
    %p52 = scmp.eq.s32.totalorder %s14, 1
    %p53 = por %p51, %p52
    %p54 = scmp.ne.s32.totalorder %s45, %s46
    %p55 = scmp.eq.s32.totalorder %s14, 0
    %p56 = por %p54, %p55
    %p57 = scmp.ne.s32.totalorder %s45, %s46
    %p58 = scmp.eq.s32.totalorder %s15, 1
    %p59 = por %p57, %p58
    %p61 = scmp.ne.s32.totalorder %s46, %s60
    %p62 = scmp.eq.s32.totalorder %s15, 0
    %p63 = por %p61, %p62
    %s65 = sadd.s32 %s64, 1
    %p68 = scmp.eq.s32.totalorder %s9, 1
    %p69 = scmp.ne.s32.totalorder %s64, %s66
    %p70 = scmp.eq.s32.totalorder %s9, 0
    %p71 = por %p69, %p70
    %p72 = scmp.ne.s32.totalorder %s64, %s66
    %p73 = scmp.eq.s32.totalorder %s14, 1
    %p74 = por %p72, %p73
    %p75 = scmp.ne.s32.totalorder %s66, %s67
    %p76 = scmp.eq.s32.totalorder %s14, 0
    %p77 = por %p75, %p76
    %p78 = scmp.ne.s32.totalorder %s66, %s67
    %p79 = scmp.eq.s32.totalorder %s15, 1
    %p80 = por %p78, %p79
    %p82 = scmp.ne.s32.totalorder %s67, %s81
    %p83 = scmp.eq.s32.totalorder %s15, 0
    %p84 = por %p82, %p83
    %s85 = ssub.s32 %s9, %s16
    %p86 = scmp.eq.s32.totalorder %s85, 0
    %s88 = sadd.s32 %s87, 1
    %s89 = scalar_select %p86, %s87, %s88
    %p92 = pneg %p86
    %p93 = scmp.eq.s32.totalorder %s9, 1
    %p94 = por %p92, %p93
    %p95 = scmp.ne.s32.totalorder %s87, %s90
    %p96 = scmp.eq.s32.totalorder %s9, 0
    %p97 = por %p95, %p96
    %p98 = scmp.ne.s32.totalorder %s87, %s90
    %p99 = scmp.eq.s32.totalorder %s14, 1
    %p100 = por %p98, %p99
    %p101 = scmp.ne.s32.totalorder %s90, %s91
    %p102 = scmp.eq.s32.totalorder %s14, 0
    %p103 = por %p101, %p102
    %p104 = scmp.ne.s32.totalorder %s90, %s91
    %p105 = scmp.eq.s32.totalorder %s15, 1
    %p106 = por %p104, %p105
    %p108 = scmp.ne.s32.totalorder %s91, %s107
    %p109 = scmp.eq.s32.totalorder %s15, 0
    %p110 = por %p108, %p109
    %p111 = scmp.le.s32.totalorder 1, %s9
    %p112 = scmp.lt.s32.totalorder %s9, 3
    %p113 = pnand %p111, %p112
    %p114 = pneg %p113
    // Predicated region
    $region9: #{risk_detection_forward.5} parent=5 // pred_check
      _
    $region10: #{risk_detection_forward.5} parent=5 // pred_check_branch
      %116 = sbr.rel (%p113) target = $region12
    $region11: #{risk_detection_forward.5} parent=5 // pred_region
      %s117 = ssub.s32 %s9, 1
      // Predicated region
      $region13: #{risk_detection_forward.5} parent=11 // pred_check
        %p118 = pneg %p56
      $region14: #{risk_detection_forward.5} parent=11 // pred_check_branch
        %120 = sbr.rel (%p118) target = $region16
      $region15: #{risk_detection_forward.5} parent=11 // pred_region
        _
      $region16: #{risk_detection_forward.5} parent=11 // pred_fallthru
        _
      // Predicated region
      $region17: #{risk_detection_forward.5} parent=11 // pred_check
        %p121 = pneg %p77
      $region18: #{risk_detection_forward.5} parent=11 // pred_check_branch
        %123 = sbr.rel (%p121) target = $region20
      $region19: #{risk_detection_forward.5} parent=11 // pred_region
        _
      $region20: #{risk_detection_forward.5} parent=11 // pred_fallthru
        _
    $region12: #{risk_detection_forward.5} parent=5 // pred_fallthru
      _
    %p124 = scmp.lt.s32.totalorder %s9, 2
    // Predicated region
    $region21: #{risk_detection_forward.5} parent=5 // pred_check
      %p125 = pneg %p124
    $region22: #{risk_detection_forward.5} parent=5 // pred_check_branch
      %127 = sbr.rel (%p125) target = $region24
    $region23: #{risk_detection_forward.5} parent=5 // pred_region
      // Predicated region
      $region25: #{risk_detection_forward.5} parent=23 // pred_check
        %p128 = pneg %p29
      $region26: #{risk_detection_forward.5} parent=23 // pred_check_branch
        %130 = sbr.rel (%p128) target = $region28
      $region27: #{risk_detection_forward.5} parent=23 // pred_region
        %s131 = smul.u32 2, %s9
        %p132 = scmp.lt.s32.totalorder %s131, 3
        %s133 = scalar_select %p132, %s131, 3
        %s134 = smul.addr %s133, 8
        %s135 = smul.addr %s134, 4
        %s136 = scalar_lea.vmem %s0, %s135
        %s137 = smul.u32 2, %s9
      $region28: #{risk_detection_forward.5} parent=23 // pred_fallthru
        _
    $region24: #{risk_detection_forward.5} parent=5 // pred_fallthru
      _
    %p138 = scmp.le.s32.totalorder 1, %s9
    %p139 = scmp.lt.s32.totalorder %s9, 3
    %p140 = pnand %p138, %p139
    %p141 = pneg %p140
    // Predicated region
    $region29: #{risk_detection_forward.5} parent=5 // pred_check
      _
    $region30: #{risk_detection_forward.5} parent=5 // pred_check_branch
      %143 = sbr.rel (%p140) target = $region32
    $region31: #{risk_detection_forward.5} parent=5 // pred_region
      %s144 = ssub.s32 %s9, 1
      %s145 = smul.u32 2, %s14
      %p146 = scmp.lt.s32.totalorder %s145, 3
      %s147 = scalar_select %p146, %s145, 3
      %s148 = smul.addr %s147, 8
      %s149 = smul.addr %s148, 4
      %s150 = scalar_lea.vmem %s0, %s149
      %p151 = pneg %p35
      %p152 = pneg %p32
      %p153 = pneg %p56
      %p154 = pneg %p53
      %p155 = pneg %p77
      %p156 = pneg %p74
      %p157 = pneg %p103
      %p158 = pneg %p100
      %s159 = smul.u32 2, %s14
      %p160 = scmp.lt.s32.totalorder %s159, 3
      %s161 = scalar_select %p160, %s159, 3
      %s162 = smul.addr %s161, 4
      %s163 = scalar_lea.vmem %s3, %s162
      %s164 = smul.u32 2, %s14
      %p165 = scmp.lt.s32.totalorder %s164, 3
      %s166 = scalar_select %p165, %s164, 3
      %s167 = smul.addr %s166, 8
      %s168 = smul.addr %s167, 4
      %s169 = scalar_lea.vmem %s0, %s168
      %s170 = smul.u32 2, %s14
      %s171 = smul.u32 2, %s14
      %p172 = scmp.lt.s32.totalorder %s171, 3
      %s173 = scalar_select %p172, %s171, 3
      %s174 = smul.addr %s173, 4
      %s175 = scalar_lea.vmem %s3, %s174
      %s176 = smul.u32 2, %s14
      %v177 = vld [vmem:[%s169] sm:$0xff]
      %v178 = vld [vmem:[%s169 + $0x8] sm:$0xff]
      %v179 = vld [vmem:[%s169 + $0x10] sm:$0xff]
      %v180 = vld [vmem:[%s169 + $0x18] sm:$0xff]
      %v181 = vld [vmem:[%s169 + $0x20] sm:$0xff]
      %v182 = vld [vmem:[%s169 + $0x28] sm:$0xff]
      %v183 = vld [vmem:[%s169 + $0x30] sm:$0xff]
      %v184 = vld [vmem:[%s169 + $0x38] sm:$0xff]
      %v185 = vld [vmem:[%s1] sm:$0xf]
      %v186 = vld [vmem:[%s1 + $0x4] sm:$0xf]
      %v187 = vld [vmem:[%s1 + $0x8] sm:$0xf]
      %v188 = vld [vmem:[%s1 + $0xc] sm:$0xf]
      %v189 = vld [vmem:[%s1 + $0x10] sm:$0xf]
      %v190 = vld [vmem:[%s1 + $0x14] sm:$0xf]
      %v191 = vld [vmem:[%s1 + $0x18] sm:$0xf]
      %v192 = vld [vmem:[%s1 + $0x1c] sm:$0xf]
      %v193 = vld [vmem:[%s1 + $0x20] sm:$0xf]
      %v194 = vld [vmem:[%s1 + $0x24] sm:$0xf]
      %v195 = vld [vmem:[%s1 + $0x28] sm:$0xf]
      %v196 = vld [vmem:[%s1 + $0x2c] sm:$0xf]
      %v197 = vld [vmem:[%s1 + $0x30] sm:$0xf]
      %v198 = vld [vmem:[%s1 + $0x34] sm:$0xf]
      %v199 = vld [vmem:[%s1 + $0x38] sm:$0xf]
      %v200 = vld [vmem:[%s1 + $0x3c] sm:$0xf]
      %v201 = vld [vmem:[%s1 + $0x40] sm:$0xf]
      %v202 = vld [vmem:[%s1 + $0x44] sm:$0xf]
      %v203 = vld [vmem:[%s1 + $0x48] sm:$0xf]
      %v204 = vld [vmem:[%s1 + $0x4c] sm:$0xf]
      %v205 = vld [vmem:[%s1 + $0x50] sm:$0xf]
      %v206 = vld [vmem:[%s1 + $0x54] sm:$0xf]
      %v207 = vld [vmem:[%s1 + $0x58] sm:$0xf]
      %v208 = vld [vmem:[%s1 + $0x5c] sm:$0xf]
      %v209 = vld [vmem:[%s1 + $0x60] sm:$0xf]
      %v210 = vld [vmem:[%s1 + $0x64] sm:$0xf]
      %v211 = vld [vmem:[%s1 + $0x68] sm:$0xf]
      %v212 = vld [vmem:[%s1 + $0x6c] sm:$0xf]
      %v213 = vld [vmem:[%s1 + $0x70] sm:$0xf]
      %v214 = vld [vmem:[%s1 + $0x74] sm:$0xf]
      %v215 = vld [vmem:[%s1 + $0x78] sm:$0xf]
      %v216 = vld [vmem:[%s1 + $0x7c] sm:$0xf]
      %v217 = vld [vmem:[%s1 + $0x80] sm:$0xf]
      %v218 = vld [vmem:[%s1 + $0x84] sm:$0xf]
      %v219 = vld [vmem:[%s1 + $0x88] sm:$0xf]
      %v220 = vld [vmem:[%s1 + $0x8c] sm:$0xf]
      %v221 = vld [vmem:[%s1 + $0x90] sm:$0xf]
      %v222 = vld [vmem:[%s1 + $0x94] sm:$0xf]
      %v223 = vld [vmem:[%s1 + $0x98] sm:$0xf]
      %v224 = vld [vmem:[%s1 + $0x9c] sm:$0xf]
      %v225 = vld [vmem:[%s1 + $0xa0] sm:$0xf]
      %v226 = vld [vmem:[%s1 + $0xa4] sm:$0xf]
      %v227 = vld [vmem:[%s1 + $0xa8] sm:$0xf]
      %v228 = vld [vmem:[%s1 + $0xac] sm:$0xf]
      %v229 = vld [vmem:[%s1 + $0xb0] sm:$0xf]
      %v230 = vld [vmem:[%s1 + $0xb4] sm:$0xf]
      %v231 = vld [vmem:[%s1 + $0xb8] sm:$0xf]
      %v232 = vld [vmem:[%s1 + $0xbc] sm:$0xf]
      %v233 = vld [vmem:[%s1 + $0xc0] sm:$0xf]
      %v234 = vld [vmem:[%s1 + $0xc4] sm:$0xf]
      %v235 = vld [vmem:[%s1 + $0xc8] sm:$0xf]
      %v236 = vld [vmem:[%s1 + $0xcc] sm:$0xf]
      %v237 = vld [vmem:[%s1 + $0xd0] sm:$0xf]
      %v238 = vld [vmem:[%s1 + $0xd4] sm:$0xf]
      %v239 = vld [vmem:[%s1 + $0xd8] sm:$0xf]
      %v240 = vld [vmem:[%s1 + $0xdc] sm:$0xf]
      %v241 = vld [vmem:[%s1 + $0xe0] sm:$0xf]
      %v242 = vld [vmem:[%s1 + $0xe4] sm:$0xf]
      %v243 = vld [vmem:[%s1 + $0xe8] sm:$0xf]
      %v244 = vld [vmem:[%s1 + $0xec] sm:$0xf]
      %v245 = vld [vmem:[%s1 + $0xf0] sm:$0xf]
      %v246 = vld [vmem:[%s1 + $0xf4] sm:$0xf]
      %v247 = vld [vmem:[%s1 + $0xf8] sm:$0xf]
      %v248 = vld [vmem:[%s1 + $0xfc] sm:$0xf]
      %v249 = vld [vmem:[%s1 + $0x100] sm:$0xf]
      %v250 = vld [vmem:[%s1 + $0x104] sm:$0xf]
      %v251 = vld [vmem:[%s1 + $0x108] sm:$0xf]
      %v252 = vld [vmem:[%s1 + $0x10c] sm:$0xf]
      %v253 = vld [vmem:[%s1 + $0x110] sm:$0xf]
      %v254 = vld [vmem:[%s1 + $0x114] sm:$0xf]
      %v255 = vld [vmem:[%s1 + $0x118] sm:$0xf]
      %v256 = vld [vmem:[%s1 + $0x11c] sm:$0xf]
      %v257 = vld [vmem:[%s1 + $0x120] sm:$0xf]
      %v258 = vld [vmem:[%s1 + $0x124] sm:$0xf]
      %v259 = vld [vmem:[%s1 + $0x128] sm:$0xf]
      %v260 = vld [vmem:[%s1 + $0x12c] sm:$0xf]
      %v261 = vld [vmem:[%s1 + $0x130] sm:$0xf]
      %v262 = vld [vmem:[%s1 + $0x134] sm:$0xf]
      %v263 = vld [vmem:[%s1 + $0x138] sm:$0xf]
      %v264 = vld [vmem:[%s1 + $0x13c] sm:$0xf]
      %v265 = vld [vmem:[%s1 + $0x140] sm:$0xf]
      %v266 = vld [vmem:[%s1 + $0x144] sm:$0xf]
      %v267 = vld [vmem:[%s1 + $0x148] sm:$0xf]
      %v268 = vld [vmem:[%s1 + $0x14c] sm:$0xf]
      %v269 = vld [vmem:[%s1 + $0x150] sm:$0xf]
      %v270 = vld [vmem:[%s1 + $0x154] sm:$0xf]
      %v271 = vld [vmem:[%s1 + $0x158] sm:$0xf]
      %v272 = vld [vmem:[%s1 + $0x15c] sm:$0xf]
      %v273 = vld [vmem:[%s1 + $0x160] sm:$0xf]
      %v274 = vld [vmem:[%s1 + $0x164] sm:$0xf]
      %v275 = vld [vmem:[%s1 + $0x168] sm:$0xf]
      %v276 = vld [vmem:[%s1 + $0x16c] sm:$0xf]
      %v277 = vld [vmem:[%s1 + $0x170] sm:$0xf]
      %v278 = vld [vmem:[%s1 + $0x174] sm:$0xf]
      %v279 = vld [vmem:[%s1 + $0x178] sm:$0xf]
      %v280 = vld [vmem:[%s1 + $0x17c] sm:$0xf]
      %v281 = vld [vmem:[%s1 + $0x180] sm:$0xf]
      %v282 = vld [vmem:[%s1 + $0x184] sm:$0xf]
      %v283 = vld [vmem:[%s1 + $0x188] sm:$0xf]
      %v284 = vld [vmem:[%s1 + $0x18c] sm:$0xf]
      %v285 = vld [vmem:[%s1 + $0x190] sm:$0xf]
      %v286 = vld [vmem:[%s1 + $0x194] sm:$0xf]
      %v287 = vld [vmem:[%s1 + $0x198] sm:$0xf]
      %v288 = vld [vmem:[%s1 + $0x19c] sm:$0xf]
      %v289 = vld [vmem:[%s1 + $0x1a0] sm:$0xf]
      %v290 = vld [vmem:[%s1 + $0x1a4] sm:$0xf]
      %v291 = vld [vmem:[%s1 + $0x1a8] sm:$0xf]
      %v292 = vld [vmem:[%s1 + $0x1ac] sm:$0xf]
      %v293 = vld [vmem:[%s1 + $0x1b0] sm:$0xf]
      %v294 = vld [vmem:[%s1 + $0x1b4] sm:$0xf]
      %v295 = vld [vmem:[%s1 + $0x1b8] sm:$0xf]
      %v296 = vld [vmem:[%s1 + $0x1bc] sm:$0xf]
      %v297 = vld [vmem:[%s1 + $0x1c0] sm:$0xf]
      %v298 = vld [vmem:[%s1 + $0x1c4] sm:$0xf]
      %v299 = vld [vmem:[%s1 + $0x1c8] sm:$0xf]
      %v300 = vld [vmem:[%s1 + $0x1cc] sm:$0xf]
      %v301 = vld [vmem:[%s1 + $0x1d0] sm:$0xf]
      %v302 = vld [vmem:[%s1 + $0x1d4] sm:$0xf]
      %v303 = vld [vmem:[%s1 + $0x1d8] sm:$0xf]
      %v304 = vld [vmem:[%s1 + $0x1dc] sm:$0xf]
      %v305 = vld [vmem:[%s1 + $0x1e0] sm:$0xf]
      %v306 = vld [vmem:[%s1 + $0x1e4] sm:$0xf]
      %v307 = vld [vmem:[%s1 + $0x1e8] sm:$0xf]
      %v308 = vld [vmem:[%s1 + $0x1ec] sm:$0xf]
      %v309 = vld [vmem:[%s1 + $0x1f0] sm:$0xf]
      %v310 = vld [vmem:[%s1 + $0x1f4] sm:$0xf]
      %v311 = vld [vmem:[%s1 + $0x1f8] sm:$0xf]
      %v312 = vld [vmem:[%s1 + $0x1fc] sm:$0xf]
      %v313 = vld [vmem:[%s2] sm:$0x1]
      %v315 = vperm.slane %v313, 0
      %v325 = vunpack.c.l.b16 %v177
      %v326 = vunpack.c.h.b16 %v177
      %v327 = vunpack.c.l.b16 %v178
      %v328 = vunpack.c.h.b16 %v178
      %v329 = vunpack.c.l.b16 %v179
      %v330 = vunpack.c.h.b16 %v179
      %v331 = vunpack.c.l.b16 %v180
      %v332 = vunpack.c.h.b16 %v180
      %v333 = vunpack.c.l.b16 %v181
      %v334 = vunpack.c.h.b16 %v181
      %v335 = vunpack.c.l.b16 %v182
      %v336 = vunpack.c.h.b16 %v182
      %v337 = vunpack.c.l.b16 %v183
      %v338 = vunpack.c.h.b16 %v183
      %v339 = vunpack.c.l.b16 %v184
      %v340 = vunpack.c.h.b16 %v184
      %v341 = vpack.c.b16 %v333, %v325
      %v342 = vpack.c.b16 %v334, %v326
      %v343 = vpack.c.b16 %v335, %v327
      %v344 = vpack.c.b16 %v336, %v328
      %v345 = vpack.c.b16 %v337, %v329
      %v346 = vpack.c.b16 %v338, %v330
      %v347 = vpack.c.b16 %v339, %v331
      %v348 = vpack.c.b16 %v340, %v332
      %v485 = vunpack.c.l.b16 %v185
      %v486 = vunpack.c.l.b16 %v186
      %v487 = vunpack.c.l.b16 %v187
      %v488 = vunpack.c.l.b16 %v188
      %v489 = vunpack.c.l.b16 %v189
      %v490 = vunpack.c.l.b16 %v190
      %v491 = vunpack.c.l.b16 %v191
      %v492 = vunpack.c.l.b16 %v192
      %v493 = vunpack.c.l.b16 %v193
      %v494 = vunpack.c.l.b16 %v194
      %v495 = vunpack.c.l.b16 %v195
      %v496 = vunpack.c.l.b16 %v196
      %v497 = vunpack.c.l.b16 %v197
      %v498 = vunpack.c.l.b16 %v198
      %v499 = vunpack.c.l.b16 %v199
      %v500 = vunpack.c.l.b16 %v200
      %v501 = vunpack.c.l.b16 %v201
      %v502 = vunpack.c.l.b16 %v202
      %v503 = vunpack.c.l.b16 %v203
      %v504 = vunpack.c.l.b16 %v204
      %v505 = vunpack.c.l.b16 %v205
      %v506 = vunpack.c.l.b16 %v206
      %v507 = vunpack.c.l.b16 %v207
      %v508 = vunpack.c.l.b16 %v208
      %v509 = vunpack.c.l.b16 %v209
      %v510 = vunpack.c.l.b16 %v210
      %v511 = vunpack.c.l.b16 %v211
      %v512 = vunpack.c.l.b16 %v212
      %v513 = vunpack.c.l.b16 %v213
      %v514 = vunpack.c.l.b16 %v214
      %v515 = vunpack.c.l.b16 %v215
      %v516 = vunpack.c.l.b16 %v216
      %v517 = vunpack.c.l.b16 %v217
      %v518 = vunpack.c.l.b16 %v218
      %v519 = vunpack.c.l.b16 %v219
      %v520 = vunpack.c.l.b16 %v220
      %v521 = vunpack.c.l.b16 %v221
      %v522 = vunpack.c.l.b16 %v222
      %v523 = vunpack.c.l.b16 %v223
      %v524 = vunpack.c.l.b16 %v224
      %v525 = vunpack.c.l.b16 %v225
      %v526 = vunpack.c.l.b16 %v226
      %v527 = vunpack.c.l.b16 %v227
      %v528 = vunpack.c.l.b16 %v228
      %v529 = vunpack.c.l.b16 %v229
      %v530 = vunpack.c.l.b16 %v230
      %v531 = vunpack.c.l.b16 %v231
      %v532 = vunpack.c.l.b16 %v232
      %v533 = vunpack.c.l.b16 %v233
      %v534 = vunpack.c.l.b16 %v234
      %v535 = vunpack.c.l.b16 %v235
      %v536 = vunpack.c.l.b16 %v236
      %v537 = vunpack.c.l.b16 %v237
      %v538 = vunpack.c.l.b16 %v238
      %v539 = vunpack.c.l.b16 %v239
      %v540 = vunpack.c.l.b16 %v240
      %v541 = vunpack.c.l.b16 %v241
      %v542 = vunpack.c.l.b16 %v242
      %v543 = vunpack.c.l.b16 %v243
      %v544 = vunpack.c.l.b16 %v244
      %v545 = vunpack.c.l.b16 %v245
      %v546 = vunpack.c.l.b16 %v246
      %v547 = vunpack.c.l.b16 %v247
      %v548 = vunpack.c.l.b16 %v248
      %v549 = vunpack.c.l.b16 %v249
      %v550 = vunpack.c.l.b16 %v250
      %v551 = vunpack.c.l.b16 %v251
      %v552 = vunpack.c.l.b16 %v252
      %v553 = vunpack.c.l.b16 %v253
      %v554 = vunpack.c.l.b16 %v254
      %v555 = vunpack.c.l.b16 %v255
      %v556 = vunpack.c.l.b16 %v256
      %v557 = vunpack.c.l.b16 %v257
      %v558 = vunpack.c.l.b16 %v258
      %v559 = vunpack.c.l.b16 %v259
      %v560 = vunpack.c.l.b16 %v260
      %v561 = vunpack.c.l.b16 %v261
      %v562 = vunpack.c.l.b16 %v262
      %v563 = vunpack.c.l.b16 %v263
      %v564 = vunpack.c.l.b16 %v264
      %v565 = vunpack.c.l.b16 %v265
      %v566 = vunpack.c.l.b16 %v266
      %v567 = vunpack.c.l.b16 %v267
      %v568 = vunpack.c.l.b16 %v268
      %v569 = vunpack.c.l.b16 %v269
      %v570 = vunpack.c.l.b16 %v270
      %v571 = vunpack.c.l.b16 %v271
      %v572 = vunpack.c.l.b16 %v272
      %v573 = vunpack.c.l.b16 %v273
      %v574 = vunpack.c.l.b16 %v274
      %v575 = vunpack.c.l.b16 %v275
      %v576 = vunpack.c.l.b16 %v276
      %v577 = vunpack.c.l.b16 %v277
      %v578 = vunpack.c.l.b16 %v278
      %v579 = vunpack.c.l.b16 %v279
      %v580 = vunpack.c.l.b16 %v280
      %v581 = vunpack.c.l.b16 %v281
      %v582 = vunpack.c.l.b16 %v282
      %v583 = vunpack.c.l.b16 %v283
      %v584 = vunpack.c.l.b16 %v284
      %v585 = vunpack.c.l.b16 %v285
      %v586 = vunpack.c.l.b16 %v286
      %v587 = vunpack.c.l.b16 %v287
      %v588 = vunpack.c.l.b16 %v288
      %v589 = vunpack.c.l.b16 %v289
      %v590 = vunpack.c.l.b16 %v290
      %v591 = vunpack.c.l.b16 %v291
      %v592 = vunpack.c.l.b16 %v292
      %v593 = vunpack.c.l.b16 %v293
      %v594 = vunpack.c.l.b16 %v294
      %v595 = vunpack.c.l.b16 %v295
      %v596 = vunpack.c.l.b16 %v296
      %v597 = vunpack.c.l.b16 %v297
      %v598 = vunpack.c.l.b16 %v298
      %v599 = vunpack.c.l.b16 %v299
      %v600 = vunpack.c.l.b16 %v300
      %v601 = vunpack.c.l.b16 %v301
      %v602 = vunpack.c.l.b16 %v302
      %v603 = vunpack.c.l.b16 %v303
      %v604 = vunpack.c.l.b16 %v304
      %v605 = vunpack.c.l.b16 %v305
      %v606 = vunpack.c.l.b16 %v306
      %v607 = vunpack.c.l.b16 %v307
      %v608 = vunpack.c.l.b16 %v308
      %v609 = vunpack.c.l.b16 %v309
      %v610 = vunpack.c.l.b16 %v310
      %v611 = vunpack.c.l.b16 %v311
      %v612 = vunpack.c.l.b16 %v312
      %v613 = vpack.c.b16 %v486, %v485
      %v614 = vpack.c.b16 %v488, %v487
      %v615 = vpack.c.b16 %v490, %v489
      %v616 = vpack.c.b16 %v492, %v491
      %v617 = vpack.c.b16 %v494, %v493
      %v618 = vpack.c.b16 %v496, %v495
      %v619 = vpack.c.b16 %v498, %v497
      %v620 = vpack.c.b16 %v500, %v499
      %v621 = vpack.c.b16 %v502, %v501
      %v622 = vpack.c.b16 %v504, %v503
      %v623 = vpack.c.b16 %v506, %v505
      %v624 = vpack.c.b16 %v508, %v507
      %v625 = vpack.c.b16 %v510, %v509
      %v626 = vpack.c.b16 %v512, %v511
      %v627 = vpack.c.b16 %v514, %v513
      %v628 = vpack.c.b16 %v516, %v515
      %v629 = vpack.c.b16 %v518, %v517
      %v630 = vpack.c.b16 %v520, %v519
      %v631 = vpack.c.b16 %v522, %v521
      %v632 = vpack.c.b16 %v524, %v523
      %v633 = vpack.c.b16 %v526, %v525
      %v634 = vpack.c.b16 %v528, %v527
      %v635 = vpack.c.b16 %v530, %v529
      %v636 = vpack.c.b16 %v532, %v531
      %v637 = vpack.c.b16 %v534, %v533
      %v638 = vpack.c.b16 %v536, %v535
      %v639 = vpack.c.b16 %v538, %v537
      %v640 = vpack.c.b16 %v540, %v539
      %v641 = vpack.c.b16 %v542, %v541
      %v642 = vpack.c.b16 %v544, %v543
      %v643 = vpack.c.b16 %v546, %v545
      %v644 = vpack.c.b16 %v548, %v547
      %v645 = vpack.c.b16 %v550, %v549
      %v646 = vpack.c.b16 %v552, %v551
      %v647 = vpack.c.b16 %v554, %v553
      %v648 = vpack.c.b16 %v556, %v555
      %v649 = vpack.c.b16 %v558, %v557
      %v650 = vpack.c.b16 %v560, %v559
      %v651 = vpack.c.b16 %v562, %v561
      %v652 = vpack.c.b16 %v564, %v563
      %v653 = vpack.c.b16 %v566, %v565
      %v654 = vpack.c.b16 %v568, %v567
      %v655 = vpack.c.b16 %v570, %v569
      %v656 = vpack.c.b16 %v572, %v571
      %v657 = vpack.c.b16 %v574, %v573
      %v658 = vpack.c.b16 %v576, %v575
      %v659 = vpack.c.b16 %v578, %v577
      %v660 = vpack.c.b16 %v580, %v579
      %v661 = vpack.c.b16 %v582, %v581
      %v662 = vpack.c.b16 %v584, %v583
      %v663 = vpack.c.b16 %v586, %v585
      %v664 = vpack.c.b16 %v588, %v587
      %v665 = vpack.c.b16 %v590, %v589
      %v666 = vpack.c.b16 %v592, %v591
      %v667 = vpack.c.b16 %v594, %v593
      %v668 = vpack.c.b16 %v596, %v595
      %v669 = vpack.c.b16 %v598, %v597
      %v670 = vpack.c.b16 %v600, %v599
      %v671 = vpack.c.b16 %v602, %v601
      %v672 = vpack.c.b16 %v604, %v603
      %v673 = vpack.c.b16 %v606, %v605
      %v674 = vpack.c.b16 %v608, %v607
      %v675 = vpack.c.b16 %v610, %v609
      %v676 = vpack.c.b16 %v612, %v611
      %741 = vmatpush.bf16.msra.mxu0 %v620
      %742 = vmatpush.bf16.msra.mxu0 %v619
      %743 = vmatpush.bf16.msra.mxu0 %v618
      %744 = vmatpush.bf16.msra.mxu0 %v617
      %745 = vmatpush.bf16.msra.mxu0 %v616
      %746 = vmatpush.bf16.msra.mxu0 %v615
      %747 = vmatpush.bf16.msra.mxu0 %v614
      %748 = vmatpush.bf16.msra.mxu0 %v613
      %749 = vmatmul.bf16.gmra.mxu0 %v341
      %v750 = vpop.f32.mrf.mxu0
      %v751 = vadd.f32 %v315, %v750
      %v752 = vpop.f32.mrf.mxu0
      %v753 = vadd.f32 %v315, %v752
      %754 = vdwg.mxu0
      %755 = vmatpush.bf16.msra.mxu0 %v628
      %756 = vmatpush.bf16.msra.mxu0 %v627
      %757 = vmatpush.bf16.msra.mxu0 %v626
      %758 = vmatpush.bf16.msra.mxu0 %v625
      %759 = vmatpush.bf16.msra.mxu0 %v624
      %760 = vmatpush.bf16.msra.mxu0 %v623
      %761 = vmatpush.bf16.msra.mxu0 %v622
      %762 = vmatpush.bf16.msra.mxu0 %v621
      %763 = vmatmul.bf16.gmra.mxu0 %v342
      %v764 = vpop.f32.mrf.mxu0
      %v765 = vadd.f32 %v751, %v764
      %v766 = vpop.f32.mrf.mxu0
      %v767 = vadd.f32 %v753, %v766
      %768 = vdwg.mxu0
      %769 = vmatpush.bf16.msra.mxu0 %v636
      %770 = vmatpush.bf16.msra.mxu0 %v635
      %771 = vmatpush.bf16.msra.mxu0 %v634
      %772 = vmatpush.bf16.msra.mxu0 %v633
      %773 = vmatpush.bf16.msra.mxu0 %v632
      %774 = vmatpush.bf16.msra.mxu0 %v631
      %775 = vmatpush.bf16.msra.mxu0 %v630
      %776 = vmatpush.bf16.msra.mxu0 %v629
      %777 = vmatmul.bf16.gmra.mxu0 %v343
      %v778 = vpop.f32.mrf.mxu0
      %v779 = vadd.f32 %v765, %v778
      %v780 = vpop.f32.mrf.mxu0
      %v781 = vadd.f32 %v767, %v780
      %782 = vdwg.mxu0
      %783 = vmatpush.bf16.msra.mxu0 %v644
      %784 = vmatpush.bf16.msra.mxu0 %v643
      %785 = vmatpush.bf16.msra.mxu0 %v642
      %786 = vmatpush.bf16.msra.mxu0 %v641
      %787 = vmatpush.bf16.msra.mxu0 %v640
      %788 = vmatpush.bf16.msra.mxu0 %v639
      %789 = vmatpush.bf16.msra.mxu0 %v638
      %790 = vmatpush.bf16.msra.mxu0 %v637
      %791 = vmatmul.bf16.gmra.mxu0 %v344
      %v792 = vpop.f32.mrf.mxu0
      %v793 = vadd.f32 %v779, %v792
      %v794 = vpop.f32.mrf.mxu0
      %v795 = vadd.f32 %v781, %v794
      %796 = vdwg.mxu0
      %797 = vmatpush.bf16.msra.mxu0 %v652
      %798 = vmatpush.bf16.msra.mxu0 %v651
      %799 = vmatpush.bf16.msra.mxu0 %v650
      %800 = vmatpush.bf16.msra.mxu0 %v649
      %801 = vmatpush.bf16.msra.mxu0 %v648
      %802 = vmatpush.bf16.msra.mxu0 %v647
      %803 = vmatpush.bf16.msra.mxu0 %v646
      %804 = vmatpush.bf16.msra.mxu0 %v645
      %805 = vmatmul.bf16.gmra.mxu0 %v345
      %v806 = vpop.f32.mrf.mxu0
      %v807 = vadd.f32 %v793, %v806
      %v808 = vpop.f32.mrf.mxu0
      %v809 = vadd.f32 %v795, %v808
      %810 = vdwg.mxu0
      %811 = vmatpush.bf16.msra.mxu0 %v660
      %812 = vmatpush.bf16.msra.mxu0 %v659
      %813 = vmatpush.bf16.msra.mxu0 %v658
      %814 = vmatpush.bf16.msra.mxu0 %v657
      %815 = vmatpush.bf16.msra.mxu0 %v656
      %816 = vmatpush.bf16.msra.mxu0 %v655
      %817 = vmatpush.bf16.msra.mxu0 %v654
      %818 = vmatpush.bf16.msra.mxu0 %v653
      %819 = vmatmul.bf16.gmra.mxu0 %v346
      %v820 = vpop.f32.mrf.mxu0
      %v821 = vadd.f32 %v807, %v820
      %v822 = vpop.f32.mrf.mxu0
      %v823 = vadd.f32 %v809, %v822
      %824 = vdwg.mxu0
      %825 = vmatpush.bf16.msra.mxu0 %v668
      %826 = vmatpush.bf16.msra.mxu0 %v667
      %827 = vmatpush.bf16.msra.mxu0 %v666
      %828 = vmatpush.bf16.msra.mxu0 %v665
      %829 = vmatpush.bf16.msra.mxu0 %v664
      %830 = vmatpush.bf16.msra.mxu0 %v663
      %831 = vmatpush.bf16.msra.mxu0 %v662
      %832 = vmatpush.bf16.msra.mxu0 %v661
      %833 = vmatmul.bf16.gmra.mxu0 %v347
      %v834 = vpop.f32.mrf.mxu0
      %v835 = vadd.f32 %v821, %v834
      %v836 = vpop.f32.mrf.mxu0
      %v837 = vadd.f32 %v823, %v836
      %838 = vdwg.mxu0
      %839 = vmatpush.bf16.msra.mxu0 %v676
      %840 = vmatpush.bf16.msra.mxu0 %v675
      %841 = vmatpush.bf16.msra.mxu0 %v674
      %842 = vmatpush.bf16.msra.mxu0 %v673
      %843 = vmatpush.bf16.msra.mxu0 %v672
      %844 = vmatpush.bf16.msra.mxu0 %v671
      %845 = vmatpush.bf16.msra.mxu0 %v670
      %846 = vmatpush.bf16.msra.mxu0 %v669
      %847 = vmatmul.bf16.gmra.mxu0 %v348
      %v848 = vpop.f32.mrf.mxu0
      %v849 = vadd.f32 %v835, %v848
      %v850 = vpop.f32.mrf.mxu0
      %v851 = vadd.f32 %v837, %v850
      %852 = vdwg.mxu0
      %v853 = vmax.f32 %v849, 0.0
      %v854 = vmax.f32 %v851, 0.0
      %v855 = vpack.c.bf16 %v853, %v853
      %v856 = vpack.c.bf16 %v854, %v854
      %857 = vst [vmem:[%s175] sm:$0xf] %v855
      %858 = vst [vmem:[%s175 + $0x4] sm:$0xf] %v856
      %s859 = smul.u32 2, %s14
      %p860 = scmp.lt.s32.totalorder %s859, 3
      %s861 = scalar_select %p860, %s859, 3
      %s862 = smul.addr %s861, 4
      %s863 = scalar_lea.vmem %s3, %s862
      // Predicated region
      $region33: #{risk_detection_forward.5} parent=31 // pred_check
        %p864 = pneg %p100
      $region34: #{risk_detection_forward.5} parent=31 // pred_check_branch
        %866 = sbr.rel (%p864) target = $region36
      $region35: #{risk_detection_forward.5} parent=31 // pred_region
        %s867 = smul.u32 2, %s14
      $region36: #{risk_detection_forward.5} parent=31 // pred_fallthru
        _
    $region32: #{risk_detection_forward.5} parent=5 // pred_fallthru
      _
    %p868 = scmp.le.s32.totalorder 2, %s9
    // Predicated region
    $region37: #{risk_detection_forward.5} parent=5 // pred_check
      %p869 = pneg %p868
    $region38: #{risk_detection_forward.5} parent=5 // pred_check_branch
      %871 = sbr.rel (%p869) target = $region40
    $region39: #{risk_detection_forward.5} parent=5 // pred_region
      %s872 = ssub.s32 %s9, 2
      // Predicated region
      $region41: #{risk_detection_forward.5} parent=39 // pred_check
        %p873 = pneg %p106
      $region42: #{risk_detection_forward.5} parent=39 // pred_check_branch
        %875 = sbr.rel (%p873) target = $region44
      $region43: #{risk_detection_forward.5} parent=39 // pred_region
        %s876 = smul.u32 2, %s15
        %p877 = scmp.lt.s32.totalorder %s876, 3
        %s878 = scalar_select %p877, %s876, 3
        %s879 = smul.addr %s878, 4
        %s880 = scalar_lea.vmem %s3, %s879
      $region44: #{risk_detection_forward.5} parent=39 // pred_fallthru
        _
    $region40: #{risk_detection_forward.5} parent=5 // pred_fallthru
      _
  $region6: #{risk_detection_forward.5} parent=0 // loop_footer
    %s13 = sadd.s32 1, %s9
  $region7: #{risk_detection_forward.5} parent=0 // loop_footer_branch
    %8 = sbr.rel target = $region3
  $region8: #{risk_detection_forward.5} parent=0 // loop_exit
    _

// kernel: risk_detection_forward.7
$region0: #{risk_detection_forward.7}
  #allocation0 [shape = 'u32[]', space=smem, size = 0x4, offset = 0x4, fixed_abs, tag = 'smem constant byte address 0x4 - core index']
  #allocation1 [shape = 'u32[72,128]{1,0:T(1,128)}', space=vmem, size = 0x9000, scoped, tag = 'internal scratch']
  #allocation2 [shape = 'f32[2,1]{1,0:T(2,128)}', space=vmem, size = 0x400, scoped, tag = 'scratch operand']
  #allocation3 [shape = 'f32[1,1]{1,0:T(1,128)S(1)}', space=vmem, size = 0x200, scoped, tag = 'scoped memory for risk_detection_forward.7']
  %s0 = inlined_call_operand.vmem [shape: bf16[2,1024], index: 0, kind: input, shape index: {}]
  %s1 = inlined_call_operand.vmem [shape: bf16[1,1024], index: 1, kind: input, shape index: {}]
  %s2 = inlined_call_operand.<no memory space> [shape: f32[1,1], index: 2, kind: input, shape index: {}]
  %s3 = inlined_call_operand.vmem [shape: f32[2,1], index: 3, kind: output, shape index: {}]
  %s4 = sld [smem:[#allocation0]]
  $region30: #{risk_detection_forward.7} parent=0
    _
  %s6 = ssub.s32 1, %s4
  %s7 = scalar_select 0, %s6, %s4
  %v8 = vstv %s2
  %9 = vst [vmem:[#allocation3] sm:$0x1] %v8
  // Predicated region
  $region2: #{risk_detection_forward.7} parent=0 // pred_check
    _
  $region3: #{risk_detection_forward.7} parent=0 // pred_check_branch
    %11 = sbr.rel (0) target = $region5
  $region4: #{risk_detection_forward.7} parent=0 // pred_region
    _
  $region5: #{risk_detection_forward.7} parent=0 // pred_fallthru
    _
  // Predicated region
  $region6: #{risk_detection_forward.7} parent=0 // pred_check
    _
  $region7: #{risk_detection_forward.7} parent=0 // pred_check_branch
    %13 = sbr.rel (0) target = $region9
  $region8: #{risk_detection_forward.7} parent=0 // pred_region
    _
  $region9: #{risk_detection_forward.7} parent=0 // pred_fallthru
    _
  // Predicated region
  $region10: #{risk_detection_forward.7} parent=0 // pred_check
    _
  $region11: #{risk_detection_forward.7} parent=0 // pred_check_branch
    %15 = sbr.rel (0) target = $region13
  $region12: #{risk_detection_forward.7} parent=0 // pred_region
    _
  $region13: #{risk_detection_forward.7} parent=0 // pred_fallthru
    _
  %p16 = scmp.eq.s32.totalorder 0, 0
  // Predicated region
  $region14: #{risk_detection_forward.7} parent=0 // pred_check
    %p17 = pneg %p16
  $region15: #{risk_detection_forward.7} parent=0 // pred_check_branch
    %19 = sbr.rel (%p17) target = $region17
  $region16: #{risk_detection_forward.7} parent=0 // pred_region
    %vm20 = vcmask 1024
    %21 = vst.msk [vmem:[#allocation2] sm:$0x3] %vm20, 0.0
  $region17: #{risk_detection_forward.7} parent=0 // pred_fallthru
    _
  %v22 = vld [vmem:[%s0] sm:$0xff]
  %v23 = vunpack.c.l.bf16 %v22
  %v24 = vunpack.c.h.bf16 %v22
  %v25 = vld [vmem:[%s1] sm:$0xff]
  %v26 = vunpack.c.l.bf16 %v25
  %v27 = vunpack.c.h.bf16 %v25
  %v30 = vperm.slane %v26, 0
  %v31 = vperm.slane %v26, 2
  %v32 = vperm.slane %v26, 4
  %v33 = vperm.slane %v26, 6
  %v34 = vperm.slane %v27, 0
  %v35 = vperm.slane %v27, 2
  %v36 = vperm.slane %v27, 4
  %v37 = vperm.slane %v27, 6
  %v46 = vperm.slane %v30, 0
  %v47 = vperm.slane %v31, 0
  %v48 = vperm.slane %v32, 0
  %v49 = vperm.slane %v33, 0
  %v50 = vperm.slane %v34, 0
  %v51 = vperm.slane %v35, 0
  %v52 = vperm.slane %v36, 0
  %v53 = vperm.slane %v37, 0
  %v62 = vrot.slane %v47, 6
  %v63 = vrot.slane %v48, 4
  %v64 = vrot.slane %v49, 2
  %v65 = vrot.slane %v51, 6
  %v66 = vrot.slane %v52, 4
  %v67 = vrot.slane %v53, 2
  %vm68 = vcmask 1041408
  %v69 = vsel %vm68, %v46, %v62
  %vm70 = vcmask 1045508
  %v71 = vsel %vm70, %v63, %v64
  %vm72 = vcmask 1043456
  %v73 = vsel %vm72, %v69, %v71
  %v74 = vsel %vm68, %v50, %v65
  %v75 = vsel %vm70, %v66, %v67
  %v76 = vsel %vm72, %v74, %v75
  %v79 = vmul.f32 %v23, %v73
  %v80 = vmul.f32 %v24, %v76
  %v81 = vld [vmem:[#allocation2] sm:$0x3]
  %84 = vst [vmem:[#allocation1] ss:$4 sm:$0xff] %v79
  %s85 = scalar_lea.vmem [#allocation1], 32
  %86 = vst [vmem:[%s85] ss:$4 sm:$0xff] %v80
  %v87 = vld.sshfl [vmem:[#allocation1] sm:$0xff pattern:$0x73625140]
  %v88 = vld.sshfl [vmem:[#allocation1 + $0x8] sm:$0xff pattern:$0x73625140]
  %v89 = vld.sshfl [vmem:[#allocation1 + $0x10] sm:$0xff pattern:$0x73625140]
  %v90 = vld.sshfl [vmem:[#allocation1 + $0x18] sm:$0xff pattern:$0x73625140]
  %v91 = vld.sshfl [vmem:[#allocation1 + $0x20] sm:$0xff pattern:$0x73625140]
  %v92 = vld.sshfl [vmem:[#allocation1 + $0x28] sm:$0xff pattern:$0x73625140]
  %v93 = vld.sshfl [vmem:[#allocation1 + $0x30] sm:$0xff pattern:$0x73625140]
  %v94 = vld.sshfl [vmem:[#allocation1 + $0x38] sm:$0xff pattern:$0x73625140]
  %v103 = vsel %vm68, %v87, 0.0
  %v104 = vsel %vm68, %v88, 0.0
  %v105 = vadd.f32 %v103, %v104
  %v106 = vsel %vm68, %v89, 0.0
  %v107 = vadd.f32 %v105, %v106
  %v108 = vsel %vm68, %v90, 0.0
  %v109 = vadd.f32 %v107, %v108
  %v110 = vsel %vm68, %v91, 0.0
  %v111 = vadd.f32 %v109, %v110
  %v112 = vsel %vm68, %v92, 0.0
  %v113 = vadd.f32 %v111, %v112
  %v114 = vsel %vm68, %v93, 0.0
  %v115 = vadd.f32 %v113, %v114
  %v116 = vsel %vm68, %v94, 0.0
  %v117 = vadd.f32 %v115, %v116
  %118 = vadd.xlane.f32.xlu0 %v117
  %v119 = vpop.xlane.xlu0 %118
  %v120 = vadd.f32 %v81, %v119
  %vm121 = vcmask 1024
  %122 = vst.msk [vmem:[#allocation2] sm:$0x3] %vm121, %v120
  // Predicated region
  $region18: #{risk_detection_forward.7} parent=0 // pred_check
    %p123 = pneg %p16
  $region19: #{risk_detection_forward.7} parent=0 // pred_check_branch
    %125 = sbr.rel (%p123) target = $region21
  $region20: #{risk_detection_forward.7} parent=0 // pred_region
    %v126 = vld [vmem:[#allocation2] sm:$0x3]
    %v127 = vld [vmem:[#allocation3] sm:$0x1]
    %v129 = vperm.slane %v127, 0
    %v131 = vadd.f32 %v126, %v129
    %v132 = vxor.u32 %v131, 2147483648
    %v133 = vmul.f32 %v132, 1.442695
    %v134 = vpow.pop %v133
    %v135 = vadd.f32 %v134, 1.0
    %v136 = vrcp.pop %v135
    %v137 = vmul.f32 %v135, %v136
    %v138 = vsub.f32 1.0, %v137
    %v139 = vmul.f32 %v136, %v138
    %v140 = vadd.f32 %v136, %v139
    %vm141 = vweird.f32 %v135
    %vm142 = vweird.f32 %v136
    %vm143 = vmor %vm141, %vm142
    %v144 = vsel %vm143, %v136, %v140
    %v145 = vand.u32 2147483647, %v135
    %vm146 = vcmp.eq.f32.partialorder %v145, 8.507059e+37
    %v147 = vand.u32 %v135, 2147483648
    %v148 = vor.u32 1.1754944e-38, %v147
    %v149 = vsel %vm146, %v148, %v144
    %v150 = vmul.f32 1.0, %v149
    %151 = vst.msk [vmem:[%s3] sm:$0x3] %vm121, %v150
  $region21: #{risk_detection_forward.7} parent=0 // pred_fallthru
    _
  // Predicated region
  $region22: #{risk_detection_forward.7} parent=0 // pred_check
    _
  $region23: #{risk_detection_forward.7} parent=0 // pred_check_branch
    %153 = sbr.rel (0) target = $region25
  $region24: #{risk_detection_forward.7} parent=0 // pred_region
    _
  $region25: #{risk_detection_forward.7} parent=0 // pred_fallthru
    _
  // Predicated region
  $region26: #{risk_detection_forward.7} parent=0 // pred_check
    _
  $region27: #{risk_detection_forward.7} parent=0 // pred_check_branch
    %155 = sbr.rel (0) target = $region29
  $region28: #{risk_detection_forward.7} parent=0 // pred_region
    _
  $region29: #{risk_detection_forward.7} parent=0 // pred_fallthru
    _

// kernel: risk_detection_forward.6
$region0: #{risk_detection_forward.6}
  #allocation0 [shape = 'u32[]', space=smem, size = 0x4, offset = 0x4, fixed_abs, tag = 'smem constant byte address 0x4 - core index']
  #allocation1 [shape = 'u32[72,128]{1,0:T(1,128)}', space=vmem, size = 0x9000, scoped, tag = 'internal scratch']
  %s0 = inlined_call_operand.vmem [shape: bf16[8,2048], index: 0, kind: input, shape index: {}]
  %s1 = inlined_call_operand.vmem [shape: bf16[2048,256], index: 1, kind: input, shape index: {}]
  %s2 = inlined_call_operand.vmem [shape: f32[1,256], index: 2, kind: input, shape index: {}]
  %s3 = inlined_call_operand.vmem [shape: bf16[8,256], index: 3, kind: output, shape index: {}]
  %s4 = sld [smem:[#allocation0]]
  $region22: #{risk_detection_forward.6} parent=0
    _
  %s6 = ssub.s32 1, %s4
  %s7 = scalar_select 0, %s6, %s4
  // Predicated region
  $region2: #{risk_detection_forward.6} parent=0 // pred_check
    _
  $region3: #{risk_detection_forward.6} parent=0 // pred_check_branch
    %9 = sbr.rel (0) target = $region5
  $region4: #{risk_detection_forward.6} parent=0 // pred_region
    _
  $region5: #{risk_detection_forward.6} parent=0 // pred_fallthru
    _
  // Predicated region
  $region6: #{risk_detection_forward.6} parent=0 // pred_check
    _
  $region7: #{risk_detection_forward.6} parent=0 // pred_check_branch
    %11 = sbr.rel (0) target = $region9
  $region8: #{risk_detection_forward.6} parent=0 // pred_region
    _
  $region9: #{risk_detection_forward.6} parent=0 // pred_fallthru
    _
  // Predicated region
  $region10: #{risk_detection_forward.6} parent=0 // pred_check
    _
  $region11: #{risk_detection_forward.6} parent=0 // pred_check_branch
    %13 = sbr.rel (0) target = $region13
  $region12: #{risk_detection_forward.6} parent=0 // pred_region
    _
  $region13: #{risk_detection_forward.6} parent=0 // pred_fallthru
    _
  %v14 = vld [vmem:[%s0] sm:$0xff]
  %v15 = vld [vmem:[%s0 + $0x8] sm:$0xff]
  %v16 = vld [vmem:[%s0 + $0x10] sm:$0xff]
  %v17 = vld [vmem:[%s0 + $0x18] sm:$0xff]
  %v18 = vld [vmem:[%s0 + $0x20] sm:$0xff]
  %v19 = vld [vmem:[%s0 + $0x28] sm:$0xff]
  %v20 = vld [vmem:[%s0 + $0x30] sm:$0xff]
  %v21 = vld [vmem:[%s0 + $0x38] sm:$0xff]
  %v22 = vld [vmem:[%s1] sm:$0xff]
  %v23 = vld [vmem:[%s1 + $0x8] sm:$0xff]
  %v24 = vld [vmem:[%s1 + $0x10] sm:$0xff]
  %v25 = vld [vmem:[%s1 + $0x18] sm:$0xff]
  %v26 = vld [vmem:[%s1 + $0x20] sm:$0xff]
  %v27 = vld [vmem:[%s1 + $0x28] sm:$0xff]
  %v28 = vld [vmem:[%s1 + $0x30] sm:$0xff]
  %v29 = vld [vmem:[%s1 + $0x38] sm:$0xff]
  %v30 = vld [vmem:[%s1 + $0x40] sm:$0xff]
  %v31 = vld [vmem:[%s1 + $0x48] sm:$0xff]
  %v32 = vld [vmem:[%s1 + $0x50] sm:$0xff]
  %v33 = vld [vmem:[%s1 + $0x58] sm:$0xff]
  %v34 = vld [vmem:[%s1 + $0x60] sm:$0xff]
  %v35 = vld [vmem:[%s1 + $0x68] sm:$0xff]
  %v36 = vld [vmem:[%s1 + $0x70] sm:$0xff]
  %v37 = vld [vmem:[%s1 + $0x78] sm:$0xff]
  %v38 = vld [vmem:[%s1 + $0x80] sm:$0xff]
  %v39 = vld [vmem:[%s1 + $0x88] sm:$0xff]
  %v40 = vld [vmem:[%s1 + $0x90] sm:$0xff]
  %v41 = vld [vmem:[%s1 + $0x98] sm:$0xff]
  %v42 = vld [vmem:[%s1 + $0xa0] sm:$0xff]
  %v43 = vld [vmem:[%s1 + $0xa8] sm:$0xff]
  %v44 = vld [vmem:[%s1 + $0xb0] sm:$0xff]
  %v45 = vld [vmem:[%s1 + $0xb8] sm:$0xff]
  %v46 = vld [vmem:[%s1 + $0xc0] sm:$0xff]
  %v47 = vld [vmem:[%s1 + $0xc8] sm:$0xff]
  %v48 = vld [vmem:[%s1 + $0xd0] sm:$0xff]
  %v49 = vld [vmem:[%s1 + $0xd8] sm:$0xff]
  %v50 = vld [vmem:[%s1 + $0xe0] sm:$0xff]
  %v51 = vld [vmem:[%s1 + $0xe8] sm:$0xff]
  %v52 = vld [vmem:[%s1 + $0xf0] sm:$0xff]
  %v53 = vld [vmem:[%s1 + $0xf8] sm:$0xff]
  %v54 = vld [vmem:[%s1 + $0x100] sm:$0xff]
  %v55 = vld [vmem:[%s1 + $0x108] sm:$0xff]
  %v56 = vld [vmem:[%s1 + $0x110] sm:$0xff]
  %v57 = vld [vmem:[%s1 + $0x118] sm:$0xff]
  %v58 = vld [vmem:[%s1 + $0x120] sm:$0xff]
  %v59 = vld [vmem:[%s1 + $0x128] sm:$0xff]
  %v60 = vld [vmem:[%s1 + $0x130] sm:$0xff]
  %v61 = vld [vmem:[%s1 + $0x138] sm:$0xff]
  %v62 = vld [vmem:[%s1 + $0x140] sm:$0xff]
  %v63 = vld [vmem:[%s1 + $0x148] sm:$0xff]
  %v64 = vld [vmem:[%s1 + $0x150] sm:$0xff]
  %v65 = vld [vmem:[%s1 + $0x158] sm:$0xff]
  %v66 = vld [vmem:[%s1 + $0x160] sm:$0xff]
  %v67 = vld [vmem:[%s1 + $0x168] sm:$0xff]
  %v68 = vld [vmem:[%s1 + $0x170] sm:$0xff]
  %v69 = vld [vmem:[%s1 + $0x178] sm:$0xff]
  %v70 = vld [vmem:[%s1 + $0x180] sm:$0xff]
  %v71 = vld [vmem:[%s1 + $0x188] sm:$0xff]
  %v72 = vld [vmem:[%s1 + $0x190] sm:$0xff]
  %v73 = vld [vmem:[%s1 + $0x198] sm:$0xff]
  %v74 = vld [vmem:[%s1 + $0x1a0] sm:$0xff]
  %v75 = vld [vmem:[%s1 + $0x1a8] sm:$0xff]
  %v76 = vld [vmem:[%s1 + $0x1b0] sm:$0xff]
  %v77 = vld [vmem:[%s1 + $0x1b8] sm:$0xff]
  %v78 = vld [vmem:[%s1 + $0x1c0] sm:$0xff]
  %v79 = vld [vmem:[%s1 + $0x1c8] sm:$0xff]
  %v80 = vld [vmem:[%s1 + $0x1d0] sm:$0xff]
  %v81 = vld [vmem:[%s1 + $0x1d8] sm:$0xff]
  %v82 = vld [vmem:[%s1 + $0x1e0] sm:$0xff]
  %v83 = vld [vmem:[%s1 + $0x1e8] sm:$0xff]
  %v84 = vld [vmem:[%s1 + $0x1f0] sm:$0xff]
  %v85 = vld [vmem:[%s1 + $0x1f8] sm:$0xff]
  %v86 = vld [vmem:[%s1 + $0x200] sm:$0xff]
  %v87 = vld [vmem:[%s1 + $0x208] sm:$0xff]
  %v88 = vld [vmem:[%s1 + $0x210] sm:$0xff]
  %v89 = vld [vmem:[%s1 + $0x218] sm:$0xff]
  %v90 = vld [vmem:[%s1 + $0x220] sm:$0xff]
  %v91 = vld [vmem:[%s1 + $0x228] sm:$0xff]
  %v92 = vld [vmem:[%s1 + $0x230] sm:$0xff]
  %v93 = vld [vmem:[%s1 + $0x238] sm:$0xff]
  %v94 = vld [vmem:[%s1 + $0x240] sm:$0xff]
  %v95 = vld [vmem:[%s1 + $0x248] sm:$0xff]
  %v96 = vld [vmem:[%s1 + $0x250] sm:$0xff]
  %v97 = vld [vmem:[%s1 + $0x258] sm:$0xff]
  %v98 = vld [vmem:[%s1 + $0x260] sm:$0xff]
  %v99 = vld [vmem:[%s1 + $0x268] sm:$0xff]
  %v100 = vld [vmem:[%s1 + $0x270] sm:$0xff]
  %v101 = vld [vmem:[%s1 + $0x278] sm:$0xff]
  %v102 = vld [vmem:[%s1 + $0x280] sm:$0xff]
  %v103 = vld [vmem:[%s1 + $0x288] sm:$0xff]
  %v104 = vld [vmem:[%s1 + $0x290] sm:$0xff]
  %v105 = vld [vmem:[%s1 + $0x298] sm:$0xff]
  %v106 = vld [vmem:[%s1 + $0x2a0] sm:$0xff]
  %v107 = vld [vmem:[%s1 + $0x2a8] sm:$0xff]
  %v108 = vld [vmem:[%s1 + $0x2b0] sm:$0xff]
  %v109 = vld [vmem:[%s1 + $0x2b8] sm:$0xff]
  %v110 = vld [vmem:[%s1 + $0x2c0] sm:$0xff]
  %v111 = vld [vmem:[%s1 + $0x2c8] sm:$0xff]
  %v112 = vld [vmem:[%s1 + $0x2d0] sm:$0xff]
  %v113 = vld [vmem:[%s1 + $0x2d8] sm:$0xff]
  %v114 = vld [vmem:[%s1 + $0x2e0] sm:$0xff]
  %v115 = vld [vmem:[%s1 + $0x2e8] sm:$0xff]
  %v116 = vld [vmem:[%s1 + $0x2f0] sm:$0xff]
  %v117 = vld [vmem:[%s1 + $0x2f8] sm:$0xff]
  %v118 = vld [vmem:[%s1 + $0x300] sm:$0xff]
  %v119 = vld [vmem:[%s1 + $0x308] sm:$0xff]
  %v120 = vld [vmem:[%s1 + $0x310] sm:$0xff]
  %v121 = vld [vmem:[%s1 + $0x318] sm:$0xff]
  %v122 = vld [vmem:[%s1 + $0x320] sm:$0xff]
  %v123 = vld [vmem:[%s1 + $0x328] sm:$0xff]
  %v124 = vld [vmem:[%s1 + $0x330] sm:$0xff]
  %v125 = vld [vmem:[%s1 + $0x338] sm:$0xff]
  %v126 = vld [vmem:[%s1 + $0x340] sm:$0xff]
  %v127 = vld [vmem:[%s1 + $0x348] sm:$0xff]
  %v128 = vld [vmem:[%s1 + $0x350] sm:$0xff]
  %v129 = vld [vmem:[%s1 + $0x358] sm:$0xff]
  %v130 = vld [vmem:[%s1 + $0x360] sm:$0xff]
  %v131 = vld [vmem:[%s1 + $0x368] sm:$0xff]
  %v132 = vld [vmem:[%s1 + $0x370] sm:$0xff]
  %v133 = vld [vmem:[%s1 + $0x378] sm:$0xff]
  %v134 = vld [vmem:[%s1 + $0x380] sm:$0xff]
  %v135 = vld [vmem:[%s1 + $0x388] sm:$0xff]
  %v136 = vld [vmem:[%s1 + $0x390] sm:$0xff]
  %v137 = vld [vmem:[%s1 + $0x398] sm:$0xff]
  %v138 = vld [vmem:[%s1 + $0x3a0] sm:$0xff]
  %v139 = vld [vmem:[%s1 + $0x3a8] sm:$0xff]
  %v140 = vld [vmem:[%s1 + $0x3b0] sm:$0xff]
  %v141 = vld [vmem:[%s1 + $0x3b8] sm:$0xff]
  %v142 = vld [vmem:[%s1 + $0x3c0] sm:$0xff]
  %v143 = vld [vmem:[%s1 + $0x3c8] sm:$0xff]
  %v144 = vld [vmem:[%s1 + $0x3d0] sm:$0xff]
  %v145 = vld [vmem:[%s1 + $0x3d8] sm:$0xff]
  %v146 = vld [vmem:[%s1 + $0x3e0] sm:$0xff]
  %v147 = vld [vmem:[%s1 + $0x3e8] sm:$0xff]
  %v148 = vld [vmem:[%s1 + $0x3f0] sm:$0xff]
  %v149 = vld [vmem:[%s1 + $0x3f8] sm:$0xff]
  %v150 = vld [vmem:[%s1 + $0x400] sm:$0xff]
  %v151 = vld [vmem:[%s1 + $0x408] sm:$0xff]
  %v152 = vld [vmem:[%s1 + $0x410] sm:$0xff]
  %v153 = vld [vmem:[%s1 + $0x418] sm:$0xff]
  %v154 = vld [vmem:[%s1 + $0x420] sm:$0xff]
  %v155 = vld [vmem:[%s1 + $0x428] sm:$0xff]
  %v156 = vld [vmem:[%s1 + $0x430] sm:$0xff]
  %v157 = vld [vmem:[%s1 + $0x438] sm:$0xff]
  %v158 = vld [vmem:[%s1 + $0x440] sm:$0xff]
  %v159 = vld [vmem:[%s1 + $0x448] sm:$0xff]
  %v160 = vld [vmem:[%s1 + $0x450] sm:$0xff]
  %v161 = vld [vmem:[%s1 + $0x458] sm:$0xff]
  %v162 = vld [vmem:[%s1 + $0x460] sm:$0xff]
  %v163 = vld [vmem:[%s1 + $0x468] sm:$0xff]
  %v164 = vld [vmem:[%s1 + $0x470] sm:$0xff]
  %v165 = vld [vmem:[%s1 + $0x478] sm:$0xff]
  %v166 = vld [vmem:[%s1 + $0x480] sm:$0xff]
  %v167 = vld [vmem:[%s1 + $0x488] sm:$0xff]
  %v168 = vld [vmem:[%s1 + $0x490] sm:$0xff]
  %v169 = vld [vmem:[%s1 + $0x498] sm:$0xff]
  %v170 = vld [vmem:[%s1 + $0x4a0] sm:$0xff]
  %v171 = vld [vmem:[%s1 + $0x4a8] sm:$0xff]
  %v172 = vld [vmem:[%s1 + $0x4b0] sm:$0xff]
  %v173 = vld [vmem:[%s1 + $0x4b8] sm:$0xff]
  %v174 = vld [vmem:[%s1 + $0x4c0] sm:$0xff]
  %v175 = vld [vmem:[%s1 + $0x4c8] sm:$0xff]
  %v176 = vld [vmem:[%s1 + $0x4d0] sm:$0xff]
  %v177 = vld [vmem:[%s1 + $0x4d8] sm:$0xff]
  %v178 = vld [vmem:[%s1 + $0x4e0] sm:$0xff]
  %v179 = vld [vmem:[%s1 + $0x4e8] sm:$0xff]
  %v180 = vld [vmem:[%s1 + $0x4f0] sm:$0xff]
  %v181 = vld [vmem:[%s1 + $0x4f8] sm:$0xff]
  %v182 = vld [vmem:[%s1 + $0x500] sm:$0xff]
  %v183 = vld [vmem:[%s1 + $0x508] sm:$0xff]
  %v184 = vld [vmem:[%s1 + $0x510] sm:$0xff]
  %v185 = vld [vmem:[%s1 + $0x518] sm:$0xff]
  %v186 = vld [vmem:[%s1 + $0x520] sm:$0xff]
  %v187 = vld [vmem:[%s1 + $0x528] sm:$0xff]
  %v188 = vld [vmem:[%s1 + $0x530] sm:$0xff]
  %v189 = vld [vmem:[%s1 + $0x538] sm:$0xff]
  %v190 = vld [vmem:[%s1 + $0x540] sm:$0xff]
  %v191 = vld [vmem:[%s1 + $0x548] sm:$0xff]
  %v192 = vld [vmem:[%s1 + $0x550] sm:$0xff]
  %v193 = vld [vmem:[%s1 + $0x558] sm:$0xff]
  %v194 = vld [vmem:[%s1 + $0x560] sm:$0xff]
  %v195 = vld [vmem:[%s1 + $0x568] sm:$0xff]
  %v196 = vld [vmem:[%s1 + $0x570] sm:$0xff]
  %v197 = vld [vmem:[%s1 + $0x578] sm:$0xff]
  %v198 = vld [vmem:[%s1 + $0x580] sm:$0xff]
  %v199 = vld [vmem:[%s1 + $0x588] sm:$0xff]
  %v200 = vld [vmem:[%s1 + $0x590] sm:$0xff]
  %v201 = vld [vmem:[%s1 + $0x598] sm:$0xff]
  %v202 = vld [vmem:[%s1 + $0x5a0] sm:$0xff]
  %v203 = vld [vmem:[%s1 + $0x5a8] sm:$0xff]
  %v204 = vld [vmem:[%s1 + $0x5b0] sm:$0xff]
  %v205 = vld [vmem:[%s1 + $0x5b8] sm:$0xff]
  %v206 = vld [vmem:[%s1 + $0x5c0] sm:$0xff]
  %v207 = vld [vmem:[%s1 + $0x5c8] sm:$0xff]
  %v208 = vld [vmem:[%s1 + $0x5d0] sm:$0xff]
  %v209 = vld [vmem:[%s1 + $0x5d8] sm:$0xff]
  %v210 = vld [vmem:[%s1 + $0x5e0] sm:$0xff]
  %v211 = vld [vmem:[%s1 + $0x5e8] sm:$0xff]
  %v212 = vld [vmem:[%s1 + $0x5f0] sm:$0xff]
  %v213 = vld [vmem:[%s1 + $0x5f8] sm:$0xff]
  %v214 = vld [vmem:[%s1 + $0x600] sm:$0xff]
  %v215 = vld [vmem:[%s1 + $0x608] sm:$0xff]
  %v216 = vld [vmem:[%s1 + $0x610] sm:$0xff]
  %v217 = vld [vmem:[%s1 + $0x618] sm:$0xff]
  %v218 = vld [vmem:[%s1 + $0x620] sm:$0xff]
  %v219 = vld [vmem:[%s1 + $0x628] sm:$0xff]
  %v220 = vld [vmem:[%s1 + $0x630] sm:$0xff]
  %v221 = vld [vmem:[%s1 + $0x638] sm:$0xff]
  %v222 = vld [vmem:[%s1 + $0x640] sm:$0xff]
  %v223 = vld [vmem:[%s1 + $0x648] sm:$0xff]
  %v224 = vld [vmem:[%s1 + $0x650] sm:$0xff]
  %v225 = vld [vmem:[%s1 + $0x658] sm:$0xff]
  %v226 = vld [vmem:[%s1 + $0x660] sm:$0xff]
  %v227 = vld [vmem:[%s1 + $0x668] sm:$0xff]
  %v228 = vld [vmem:[%s1 + $0x670] sm:$0xff]
  %v229 = vld [vmem:[%s1 + $0x678] sm:$0xff]
  %v230 = vld [vmem:[%s1 + $0x680] sm:$0xff]
  %v231 = vld [vmem:[%s1 + $0x688] sm:$0xff]
  %v232 = vld [vmem:[%s1 + $0x690] sm:$0xff]
  %v233 = vld [vmem:[%s1 + $0x698] sm:$0xff]
  %v234 = vld [vmem:[%s1 + $0x6a0] sm:$0xff]
  %v235 = vld [vmem:[%s1 + $0x6a8] sm:$0xff]
  %v236 = vld [vmem:[%s1 + $0x6b0] sm:$0xff]
  %v237 = vld [vmem:[%s1 + $0x6b8] sm:$0xff]
  %v238 = vld [vmem:[%s1 + $0x6c0] sm:$0xff]
  %v239 = vld [vmem:[%s1 + $0x6c8] sm:$0xff]
  %v240 = vld [vmem:[%s1 + $0x6d0] sm:$0xff]
  %v241 = vld [vmem:[%s1 + $0x6d8] sm:$0xff]
  %v242 = vld [vmem:[%s1 + $0x6e0] sm:$0xff]
  %v243 = vld [vmem:[%s1 + $0x6e8] sm:$0xff]
  %v244 = vld [vmem:[%s1 + $0x6f0] sm:$0xff]
  %v245 = vld [vmem:[%s1 + $0x6f8] sm:$0xff]
  %v246 = vld [vmem:[%s1 + $0x700] sm:$0xff]
  %v247 = vld [vmem:[%s1 + $0x708] sm:$0xff]
  %v248 = vld [vmem:[%s1 + $0x710] sm:$0xff]
  %v249 = vld [vmem:[%s1 + $0x718] sm:$0xff]
  %v250 = vld [vmem:[%s1 + $0x720] sm:$0xff]
  %v251 = vld [vmem:[%s1 + $0x728] sm:$0xff]
  %v252 = vld [vmem:[%s1 + $0x730] sm:$0xff]
  %v253 = vld [vmem:[%s1 + $0x738] sm:$0xff]
  %v254 = vld [vmem:[%s1 + $0x740] sm:$0xff]
  %v255 = vld [vmem:[%s1 + $0x748] sm:$0xff]
  %v256 = vld [vmem:[%s1 + $0x750] sm:$0xff]
  %v257 = vld [vmem:[%s1 + $0x758] sm:$0xff]
  %v258 = vld [vmem:[%s1 + $0x760] sm:$0xff]
  %v259 = vld [vmem:[%s1 + $0x768] sm:$0xff]
  %v260 = vld [vmem:[%s1 + $0x770] sm:$0xff]
  %v261 = vld [vmem:[%s1 + $0x778] sm:$0xff]
  %v262 = vld [vmem:[%s1 + $0x780] sm:$0xff]
  %v263 = vld [vmem:[%s1 + $0x788] sm:$0xff]
  %v264 = vld [vmem:[%s1 + $0x790] sm:$0xff]
  %v265 = vld [vmem:[%s1 + $0x798] sm:$0xff]
  %v266 = vld [vmem:[%s1 + $0x7a0] sm:$0xff]
  %v267 = vld [vmem:[%s1 + $0x7a8] sm:$0xff]
  %v268 = vld [vmem:[%s1 + $0x7b0] sm:$0xff]
  %v269 = vld [vmem:[%s1 + $0x7b8] sm:$0xff]
  %v270 = vld [vmem:[%s1 + $0x7c0] sm:$0xff]
  %v271 = vld [vmem:[%s1 + $0x7c8] sm:$0xff]
  %v272 = vld [vmem:[%s1 + $0x7d0] sm:$0xff]
  %v273 = vld [vmem:[%s1 + $0x7d8] sm:$0xff]
  %v274 = vld [vmem:[%s1 + $0x7e0] sm:$0xff]
  %v275 = vld [vmem:[%s1 + $0x7e8] sm:$0xff]
  %v276 = vld [vmem:[%s1 + $0x7f0] sm:$0xff]
  %v277 = vld [vmem:[%s1 + $0x7f8] sm:$0xff]
  %v278 = vld [vmem:[%s2] sm:$0x3]
  %v280 = vperm.slane %v278, 0
  %v281 = vperm.slane %v278, 1
  %v292 = vunpack.c.l.b16 %v14
  %v293 = vunpack.c.h.b16 %v14
  %v294 = vunpack.c.l.b16 %v15
  %v295 = vunpack.c.h.b16 %v15
  %v296 = vunpack.c.l.b16 %v16
  %v297 = vunpack.c.h.b16 %v16
  %v298 = vunpack.c.l.b16 %v17
  %v299 = vunpack.c.h.b16 %v17
  %v300 = vunpack.c.l.b16 %v18
  %v301 = vunpack.c.h.b16 %v18
  %v302 = vunpack.c.l.b16 %v19
  %v303 = vunpack.c.h.b16 %v19
  %v304 = vunpack.c.l.b16 %v20
  %v305 = vunpack.c.h.b16 %v20
  %v306 = vunpack.c.l.b16 %v21
  %v307 = vunpack.c.h.b16 %v21
  %v308 = vpack.c.b16 %v292, %v292
  %v309 = vpack.c.b16 %v293, %v293
  %v310 = vpack.c.b16 %v294, %v294
  %v311 = vpack.c.b16 %v295, %v295
  %v312 = vpack.c.b16 %v296, %v296
  %v313 = vpack.c.b16 %v297, %v297
  %v314 = vpack.c.b16 %v298, %v298
  %v315 = vpack.c.b16 %v299, %v299
  %v316 = vpack.c.b16 %v300, %v300
  %v317 = vpack.c.b16 %v301, %v301
  %v318 = vpack.c.b16 %v302, %v302
  %v319 = vpack.c.b16 %v303, %v303
  %v320 = vpack.c.b16 %v304, %v304
  %v321 = vpack.c.b16 %v305, %v305
  %v322 = vpack.c.b16 %v306, %v306
  %v323 = vpack.c.b16 %v307, %v307
  %v596 = vunpack.c.l.b16 %v22
  %v597 = vunpack.c.h.b16 %v22
  %v598 = vunpack.c.l.b16 %v23
  %v599 = vunpack.c.h.b16 %v23
  %v600 = vunpack.c.l.b16 %v24
  %v601 = vunpack.c.h.b16 %v24
  %v602 = vunpack.c.l.b16 %v25
  %v603 = vunpack.c.h.b16 %v25
  %v604 = vunpack.c.l.b16 %v26
  %v605 = vunpack.c.h.b16 %v26
  %v606 = vunpack.c.l.b16 %v27
  %v607 = vunpack.c.h.b16 %v27
  %v608 = vunpack.c.l.b16 %v28
  %v609 = vunpack.c.h.b16 %v28
  %v610 = vunpack.c.l.b16 %v29
  %v611 = vunpack.c.h.b16 %v29
  %v612 = vunpack.c.l.b16 %v30
  %v613 = vunpack.c.h.b16 %v30
  %v614 = vunpack.c.l.b16 %v31
  %v615 = vunpack.c.h.b16 %v31
  %v616 = vunpack.c.l.b16 %v32
  %v617 = vunpack.c.h.b16 %v32
  %v618 = vunpack.c.l.b16 %v33
  %v619 = vunpack.c.h.b16 %v33
  %v620 = vunpack.c.l.b16 %v34
  %v621 = vunpack.c.h.b16 %v34
  %v622 = vunpack.c.l.b16 %v35
  %v623 = vunpack.c.h.b16 %v35
  %v624 = vunpack.c.l.b16 %v36
  %v625 = vunpack.c.h.b16 %v36
  %v626 = vunpack.c.l.b16 %v37
  %v627 = vunpack.c.h.b16 %v37
  %v628 = vunpack.c.l.b16 %v38
  %v629 = vunpack.c.h.b16 %v38
  %v630 = vunpack.c.l.b16 %v39
  %v631 = vunpack.c.h.b16 %v39
  %v632 = vunpack.c.l.b16 %v40
  %v633 = vunpack.c.h.b16 %v40
  %v634 = vunpack.c.l.b16 %v41
  %v635 = vunpack.c.h.b16 %v41
  %v636 = vunpack.c.l.b16 %v42
  %v637 = vunpack.c.h.b16 %v42
  %v638 = vunpack.c.l.b16 %v43
  %v639 = vunpack.c.h.b16 %v43
  %v640 = vunpack.c.l.b16 %v44
  %v641 = vunpack.c.h.b16 %v44
  %v642 = vunpack.c.l.b16 %v45
  %v643 = vunpack.c.h.b16 %v45
  %v644 = vunpack.c.l.b16 %v46
  %v645 = vunpack.c.h.b16 %v46
  %v646 = vunpack.c.l.b16 %v47
  %v647 = vunpack.c.h.b16 %v47
  %v648 = vunpack.c.l.b16 %v48
  %v649 = vunpack.c.h.b16 %v48
  %v650 = vunpack.c.l.b16 %v49
  %v651 = vunpack.c.h.b16 %v49
  %v652 = vunpack.c.l.b16 %v50
  %v653 = vunpack.c.h.b16 %v50
  %v654 = vunpack.c.l.b16 %v51
  %v655 = vunpack.c.h.b16 %v51
  %v656 = vunpack.c.l.b16 %v52
  %v657 = vunpack.c.h.b16 %v52
  %v658 = vunpack.c.l.b16 %v53
  %v659 = vunpack.c.h.b16 %v53
  %v660 = vunpack.c.l.b16 %v54
  %v661 = vunpack.c.h.b16 %v54
  %v662 = vunpack.c.l.b16 %v55
  %v663 = vunpack.c.h.b16 %v55
  %v664 = vunpack.c.l.b16 %v56
  %v665 = vunpack.c.h.b16 %v56
  %v666 = vunpack.c.l.b16 %v57
  %v667 = vunpack.c.h.b16 %v57
  %v668 = vunpack.c.l.b16 %v58
  %v669 = vunpack.c.h.b16 %v58
  %v670 = vunpack.c.l.b16 %v59
  %v671 = vunpack.c.h.b16 %v59
  %v672 = vunpack.c.l.b16 %v60
  %v673 = vunpack.c.h.b16 %v60
  %v674 = vunpack.c.l.b16 %v61
  %v675 = vunpack.c.h.b16 %v61
  %v676 = vunpack.c.l.b16 %v62
  %v677 = vunpack.c.h.b16 %v62
  %v678 = vunpack.c.l.b16 %v63
  %v679 = vunpack.c.h.b16 %v63
  %v680 = vunpack.c.l.b16 %v64
  %v681 = vunpack.c.h.b16 %v64
  %v682 = vunpack.c.l.b16 %v65
  %v683 = vunpack.c.h.b16 %v65
  %v684 = vunpack.c.l.b16 %v66
  %v685 = vunpack.c.h.b16 %v66
  %v686 = vunpack.c.l.b16 %v67
  %v687 = vunpack.c.h.b16 %v67
  %v688 = vunpack.c.l.b16 %v68
  %v689 = vunpack.c.h.b16 %v68
  %v690 = vunpack.c.l.b16 %v69
  %v691 = vunpack.c.h.b16 %v69
  %v692 = vunpack.c.l.b16 %v70
  %v693 = vunpack.c.h.b16 %v70
  %v694 = vunpack.c.l.b16 %v71
  %v695 = vunpack.c.h.b16 %v71
  %v696 = vunpack.c.l.b16 %v72
  %v697 = vunpack.c.h.b16 %v72
  %v698 = vunpack.c.l.b16 %v73
  %v699 = vunpack.c.h.b16 %v73
  %v700 = vunpack.c.l.b16 %v74
  %v701 = vunpack.c.h.b16 %v74
  %v702 = vunpack.c.l.b16 %v75
  %v703 = vunpack.c.h.b16 %v75
  %v704 = vunpack.c.l.b16 %v76
  %v705 = vunpack.c.h.b16 %v76
  %v706 = vunpack.c.l.b16 %v77
  %v707 = vunpack.c.h.b16 %v77
  %v708 = vunpack.c.l.b16 %v78
  %v709 = vunpack.c.h.b16 %v78
  %v710 = vunpack.c.l.b16 %v79
  %v711 = vunpack.c.h.b16 %v79
  %v712 = vunpack.c.l.b16 %v80
  %v713 = vunpack.c.h.b16 %v80
  %v714 = vunpack.c.l.b16 %v81
  %v715 = vunpack.c.h.b16 %v81
  %v716 = vunpack.c.l.b16 %v82
  %v717 = vunpack.c.h.b16 %v82
  %v718 = vunpack.c.l.b16 %v83
  %v719 = vunpack.c.h.b16 %v83
  %v720 = vunpack.c.l.b16 %v84
  %v721 = vunpack.c.h.b16 %v84
  %v722 = vunpack.c.l.b16 %v85
  %v723 = vunpack.c.h.b16 %v85
  %v724 = vunpack.c.l.b16 %v86
  %v725 = vunpack.c.h.b16 %v86
  %v726 = vunpack.c.l.b16 %v87
  %v727 = vunpack.c.h.b16 %v87
  %v728 = vunpack.c.l.b16 %v88
  %v729 = vunpack.c.h.b16 %v88
  %v730 = vunpack.c.l.b16 %v89
  %v731 = vunpack.c.h.b16 %v89
  %v732 = vunpack.c.l.b16 %v90
  %v733 = vunpack.c.h.b16 %v90
  %v734 = vunpack.c.l.b16 %v91
  %v735 = vunpack.c.h.b16 %v91
  %v736 = vunpack.c.l.b16 %v92
  %v737 = vunpack.c.h.b16 %v92
  %v738 = vunpack.c.l.b16 %v93
  %v739 = vunpack.c.h.b16 %v93
  %v740 = vunpack.c.l.b16 %v94
  %v741 = vunpack.c.h.b16 %v94
  %v742 = vunpack.c.l.b16 %v95
  %v743 = vunpack.c.h.b16 %v95
  %v744 = vunpack.c.l.b16 %v96
  %v745 = vunpack.c.h.b16 %v96
  %v746 = vunpack.c.l.b16 %v97
  %v747 = vunpack.c.h.b16 %v97
  %v748 = vunpack.c.l.b16 %v98
  %v749 = vunpack.c.h.b16 %v98
  %v750 = vunpack.c.l.b16 %v99
  %v751 = vunpack.c.h.b16 %v99
  %v752 = vunpack.c.l.b16 %v100
  %v753 = vunpack.c.h.b16 %v100
  %v754 = vunpack.c.l.b16 %v101
  %v755 = vunpack.c.h.b16 %v101
  %v756 = vunpack.c.l.b16 %v102
  %v757 = vunpack.c.h.b16 %v102
  %v758 = vunpack.c.l.b16 %v103
  %v759 = vunpack.c.h.b16 %v103
  %v760 = vunpack.c.l.b16 %v104
  %v761 = vunpack.c.h.b16 %v104
  %v762 = vunpack.c.l.b16 %v105
  %v763 = vunpack.c.h.b16 %v105
  %v764 = vunpack.c.l.b16 %v106
  %v765 = vunpack.c.h.b16 %v106
  %v766 = vunpack.c.l.b16 %v107
  %v767 = vunpack.c.h.b16 %v107
  %v768 = vunpack.c.l.b16 %v108
  %v769 = vunpack.c.h.b16 %v108
  %v770 = vunpack.c.l.b16 %v109
  %v771 = vunpack.c.h.b16 %v109
  %v772 = vunpack.c.l.b16 %v110
  %v773 = vunpack.c.h.b16 %v110
  %v774 = vunpack.c.l.b16 %v111
  %v775 = vunpack.c.h.b16 %v111
  %v776 = vunpack.c.l.b16 %v112
  %v777 = vunpack.c.h.b16 %v112
  %v778 = vunpack.c.l.b16 %v113
  %v779 = vunpack.c.h.b16 %v113
  %v780 = vunpack.c.l.b16 %v114
  %v781 = vunpack.c.h.b16 %v114
  %v782 = vunpack.c.l.b16 %v115
  %v783 = vunpack.c.h.b16 %v115
  %v784 = vunpack.c.l.b16 %v116
  %v785 = vunpack.c.h.b16 %v116
  %v786 = vunpack.c.l.b16 %v117
  %v787 = vunpack.c.h.b16 %v117
  %v788 = vunpack.c.l.b16 %v118
  %v789 = vunpack.c.h.b16 %v118
  %v790 = vunpack.c.l.b16 %v119
  %v791 = vunpack.c.h.b16 %v119
  %v792 = vunpack.c.l.b16 %v120
  %v793 = vunpack.c.h.b16 %v120
  %v794 = vunpack.c.l.b16 %v121
  %v795 = vunpack.c.h.b16 %v121
  %v796 = vunpack.c.l.b16 %v122
  %v797 = vunpack.c.h.b16 %v122
  %v798 = vunpack.c.l.b16 %v123
  %v799 = vunpack.c.h.b16 %v123
  %v800 = vunpack.c.l.b16 %v124
  %v801 = vunpack.c.h.b16 %v124
  %v802 = vunpack.c.l.b16 %v125
  %v803 = vunpack.c.h.b16 %v125
  %v804 = vunpack.c.l.b16 %v126
  %v805 = vunpack.c.h.b16 %v126
  %v806 = vunpack.c.l.b16 %v127
  %v807 = vunpack.c.h.b16 %v127
  %v808 = vunpack.c.l.b16 %v128
  %v809 = vunpack.c.h.b16 %v128
  %v810 = vunpack.c.l.b16 %v129
  %v811 = vunpack.c.h.b16 %v129
  %v812 = vunpack.c.l.b16 %v130
  %v813 = vunpack.c.h.b16 %v130
  %v814 = vunpack.c.l.b16 %v131
  %v815 = vunpack.c.h.b16 %v131
  %v816 = vunpack.c.l.b16 %v132
  %v817 = vunpack.c.h.b16 %v132
  %v818 = vunpack.c.l.b16 %v133
  %v819 = vunpack.c.h.b16 %v133
  %v820 = vunpack.c.l.b16 %v134
  %v821 = vunpack.c.h.b16 %v134
  %v822 = vunpack.c.l.b16 %v135
  %v823 = vunpack.c.h.b16 %v135
  %v824 = vunpack.c.l.b16 %v136
  %v825 = vunpack.c.h.b16 %v136
  %v826 = vunpack.c.l.b16 %v137
  %v827 = vunpack.c.h.b16 %v137
  %v828 = vunpack.c.l.b16 %v138
  %v829 = vunpack.c.h.b16 %v138
  %v830 = vunpack.c.l.b16 %v139
  %v831 = vunpack.c.h.b16 %v139
  %v832 = vunpack.c.l.b16 %v140
  %v833 = vunpack.c.h.b16 %v140
  %v834 = vunpack.c.l.b16 %v141
  %v835 = vunpack.c.h.b16 %v141
  %v836 = vunpack.c.l.b16 %v142
  %v837 = vunpack.c.h.b16 %v142
  %v838 = vunpack.c.l.b16 %v143
  %v839 = vunpack.c.h.b16 %v143
  %v840 = vunpack.c.l.b16 %v144
  %v841 = vunpack.c.h.b16 %v144
  %v842 = vunpack.c.l.b16 %v145
  %v843 = vunpack.c.h.b16 %v145
  %v844 = vunpack.c.l.b16 %v146
  %v845 = vunpack.c.h.b16 %v146
  %v846 = vunpack.c.l.b16 %v147
  %v847 = vunpack.c.h.b16 %v147
  %v848 = vunpack.c.l.b16 %v148
  %v849 = vunpack.c.h.b16 %v148
  %v850 = vunpack.c.l.b16 %v149
  %v851 = vunpack.c.h.b16 %v149
  %v852 = vunpack.c.l.b16 %v150
  %v853 = vunpack.c.h.b16 %v150
  %v854 = vunpack.c.l.b16 %v151
  %v855 = vunpack.c.h.b16 %v151
  %v856 = vunpack.c.l.b16 %v152
  %v857 = vunpack.c.h.b16 %v152
  %v858 = vunpack.c.l.b16 %v153
  %v859 = vunpack.c.h.b16 %v153
  %v860 = vunpack.c.l.b16 %v154
  %v861 = vunpack.c.h.b16 %v154
  %v862 = vunpack.c.l.b16 %v155
  %v863 = vunpack.c.h.b16 %v155
  %v864 = vunpack.c.l.b16 %v156
  %v865 = vunpack.c.h.b16 %v156
  %v866 = vunpack.c.l.b16 %v157
  %v867 = vunpack.c.h.b16 %v157
  %v868 = vunpack.c.l.b16 %v158
  %v869 = vunpack.c.h.b16 %v158
  %v870 = vunpack.c.l.b16 %v159
  %v871 = vunpack.c.h.b16 %v159
  %v872 = vunpack.c.l.b16 %v160
  %v873 = vunpack.c.h.b16 %v160
  %v874 = vunpack.c.l.b16 %v161
  %v875 = vunpack.c.h.b16 %v161
  %v876 = vunpack.c.l.b16 %v162
  %v877 = vunpack.c.h.b16 %v162
  %v878 = vunpack.c.l.b16 %v163
  %v879 = vunpack.c.h.b16 %v163
  %v880 = vunpack.c.l.b16 %v164
  %v881 = vunpack.c.h.b16 %v164
  %v882 = vunpack.c.l.b16 %v165
  %v883 = vunpack.c.h.b16 %v165
  %v884 = vunpack.c.l.b16 %v166
  %v885 = vunpack.c.h.b16 %v166
  %v886 = vunpack.c.l.b16 %v167
  %v887 = vunpack.c.h.b16 %v167
  %v888 = vunpack.c.l.b16 %v168
  %v889 = vunpack.c.h.b16 %v168
  %v890 = vunpack.c.l.b16 %v169
  %v891 = vunpack.c.h.b16 %v169
  %v892 = vunpack.c.l.b16 %v170
  %v893 = vunpack.c.h.b16 %v170
  %v894 = vunpack.c.l.b16 %v171
  %v895 = vunpack.c.h.b16 %v171
  %v896 = vunpack.c.l.b16 %v172
  %v897 = vunpack.c.h.b16 %v172
  %v898 = vunpack.c.l.b16 %v173
  %v899 = vunpack.c.h.b16 %v173
  %v900 = vunpack.c.l.b16 %v174
  %v901 = vunpack.c.h.b16 %v174
  %v902 = vunpack.c.l.b16 %v175
  %v903 = vunpack.c.h.b16 %v175
  %v904 = vunpack.c.l.b16 %v176
  %v905 = vunpack.c.h.b16 %v176
  %v906 = vunpack.c.l.b16 %v177
  %v907 = vunpack.c.h.b16 %v177
  %v908 = vunpack.c.l.b16 %v178
  %v909 = vunpack.c.h.b16 %v178
  %v910 = vunpack.c.l.b16 %v179
  %v911 = vunpack.c.h.b16 %v179
  %v912 = vunpack.c.l.b16 %v180
  %v913 = vunpack.c.h.b16 %v180
  %v914 = vunpack.c.l.b16 %v181
  %v915 = vunpack.c.h.b16 %v181
  %v916 = vunpack.c.l.b16 %v182
  %v917 = vunpack.c.h.b16 %v182
  %v918 = vunpack.c.l.b16 %v183
  %v919 = vunpack.c.h.b16 %v183
  %v920 = vunpack.c.l.b16 %v184
  %v921 = vunpack.c.h.b16 %v184
  %v922 = vunpack.c.l.b16 %v185
  %v923 = vunpack.c.h.b16 %v185
  %v924 = vunpack.c.l.b16 %v186
  %v925 = vunpack.c.h.b16 %v186
  %v926 = vunpack.c.l.b16 %v187
  %v927 = vunpack.c.h.b16 %v187
  %v928 = vunpack.c.l.b16 %v188
  %v929 = vunpack.c.h.b16 %v188
  %v930 = vunpack.c.l.b16 %v189
  %v931 = vunpack.c.h.b16 %v189
  %v932 = vunpack.c.l.b16 %v190
  %v933 = vunpack.c.h.b16 %v190
  %v934 = vunpack.c.l.b16 %v191
  %v935 = vunpack.c.h.b16 %v191
  %v936 = vunpack.c.l.b16 %v192
  %v937 = vunpack.c.h.b16 %v192
  %v938 = vunpack.c.l.b16 %v193
  %v939 = vunpack.c.h.b16 %v193
  %v940 = vunpack.c.l.b16 %v194
  %v941 = vunpack.c.h.b16 %v194
  %v942 = vunpack.c.l.b16 %v195
  %v943 = vunpack.c.h.b16 %v195
  %v944 = vunpack.c.l.b16 %v196
  %v945 = vunpack.c.h.b16 %v196
  %v946 = vunpack.c.l.b16 %v197
  %v947 = vunpack.c.h.b16 %v197
  %v948 = vunpack.c.l.b16 %v198
  %v949 = vunpack.c.h.b16 %v198
  %v950 = vunpack.c.l.b16 %v199
  %v951 = vunpack.c.h.b16 %v199
  %v952 = vunpack.c.l.b16 %v200
  %v953 = vunpack.c.h.b16 %v200
  %v954 = vunpack.c.l.b16 %v201
  %v955 = vunpack.c.h.b16 %v201
  %v956 = vunpack.c.l.b16 %v202
  %v957 = vunpack.c.h.b16 %v202
  %v958 = vunpack.c.l.b16 %v203
  %v959 = vunpack.c.h.b16 %v203
  %v960 = vunpack.c.l.b16 %v204
  %v961 = vunpack.c.h.b16 %v204
  %v962 = vunpack.c.l.b16 %v205
  %v963 = vunpack.c.h.b16 %v205
  %v964 = vunpack.c.l.b16 %v206
  %v965 = vunpack.c.h.b16 %v206
  %v966 = vunpack.c.l.b16 %v207
  %v967 = vunpack.c.h.b16 %v207
  %v968 = vunpack.c.l.b16 %v208
  %v969 = vunpack.c.h.b16 %v208
  %v970 = vunpack.c.l.b16 %v209
  %v971 = vunpack.c.h.b16 %v209
  %v972 = vunpack.c.l.b16 %v210
  %v973 = vunpack.c.h.b16 %v210
  %v974 = vunpack.c.l.b16 %v211
  %v975 = vunpack.c.h.b16 %v211
  %v976 = vunpack.c.l.b16 %v212
  %v977 = vunpack.c.h.b16 %v212
  %v978 = vunpack.c.l.b16 %v213
  %v979 = vunpack.c.h.b16 %v213
  %v980 = vunpack.c.l.b16 %v214
  %v981 = vunpack.c.h.b16 %v214
  %v982 = vunpack.c.l.b16 %v215
  %v983 = vunpack.c.h.b16 %v215
  %v984 = vunpack.c.l.b16 %v216
  %v985 = vunpack.c.h.b16 %v216
  %v986 = vunpack.c.l.b16 %v217
  %v987 = vunpack.c.h.b16 %v217
  %v988 = vunpack.c.l.b16 %v218
  %v989 = vunpack.c.h.b16 %v218
  %v990 = vunpack.c.l.b16 %v219
  %v991 = vunpack.c.h.b16 %v219
  %v992 = vunpack.c.l.b16 %v220
  %v993 = vunpack.c.h.b16 %v220
  %v994 = vunpack.c.l.b16 %v221
  %v995 = vunpack.c.h.b16 %v221
  %v996 = vunpack.c.l.b16 %v222
  %v997 = vunpack.c.h.b16 %v222
  %v998 = vunpack.c.l.b16 %v223
  %v999 = vunpack.c.h.b16 %v223
  %v1000 = vunpack.c.l.b16 %v224
  %v1001 = vunpack.c.h.b16 %v224
  %v1002 = vunpack.c.l.b16 %v225
  %v1003 = vunpack.c.h.b16 %v225
  %v1004 = vunpack.c.l.b16 %v226
  %v1005 = vunpack.c.h.b16 %v226
  %v1006 = vunpack.c.l.b16 %v227
  %v1007 = vunpack.c.h.b16 %v227
  %v1008 = vunpack.c.l.b16 %v228
  %v1009 = vunpack.c.h.b16 %v228
  %v1010 = vunpack.c.l.b16 %v229
  %v1011 = vunpack.c.h.b16 %v229
  %v1012 = vunpack.c.l.b16 %v230
  %v1013 = vunpack.c.h.b16 %v230
  %v1014 = vunpack.c.l.b16 %v231
  %v1015 = vunpack.c.h.b16 %v231
  %v1016 = vunpack.c.l.b16 %v232
  %v1017 = vunpack.c.h.b16 %v232
  %v1018 = vunpack.c.l.b16 %v233
  %v1019 = vunpack.c.h.b16 %v233
  %v1020 = vunpack.c.l.b16 %v234
  %v1021 = vunpack.c.h.b16 %v234
  %v1022 = vunpack.c.l.b16 %v235
  %v1023 = vunpack.c.h.b16 %v235
  %v1024 = vunpack.c.l.b16 %v236
  %v1025 = vunpack.c.h.b16 %v236
  %v1026 = vunpack.c.l.b16 %v237
  %v1027 = vunpack.c.h.b16 %v237
  %v1028 = vunpack.c.l.b16 %v238
  %v1029 = vunpack.c.h.b16 %v238
  %v1030 = vunpack.c.l.b16 %v239
  %v1031 = vunpack.c.h.b16 %v239
  %v1032 = vunpack.c.l.b16 %v240
  %v1033 = vunpack.c.h.b16 %v240
  %v1034 = vunpack.c.l.b16 %v241
  %v1035 = vunpack.c.h.b16 %v241
  %v1036 = vunpack.c.l.b16 %v242
  %v1037 = vunpack.c.h.b16 %v242
  %v1038 = vunpack.c.l.b16 %v243
  %v1039 = vunpack.c.h.b16 %v243
  %v1040 = vunpack.c.l.b16 %v244
  %v1041 = vunpack.c.h.b16 %v244
  %v1042 = vunpack.c.l.b16 %v245
  %v1043 = vunpack.c.h.b16 %v245
  %v1044 = vunpack.c.l.b16 %v246
  %v1045 = vunpack.c.h.b16 %v246
  %v1046 = vunpack.c.l.b16 %v247
  %v1047 = vunpack.c.h.b16 %v247
  %v1048 = vunpack.c.l.b16 %v248
  %v1049 = vunpack.c.h.b16 %v248
  %v1050 = vunpack.c.l.b16 %v249
  %v1051 = vunpack.c.h.b16 %v249
  %v1052 = vunpack.c.l.b16 %v250
  %v1053 = vunpack.c.h.b16 %v250
  %v1054 = vunpack.c.l.b16 %v251
  %v1055 = vunpack.c.h.b16 %v251
  %v1056 = vunpack.c.l.b16 %v252
  %v1057 = vunpack.c.h.b16 %v252
  %v1058 = vunpack.c.l.b16 %v253
  %v1059 = vunpack.c.h.b16 %v253
  %v1060 = vunpack.c.l.b16 %v254
  %v1061 = vunpack.c.h.b16 %v254
  %v1062 = vunpack.c.l.b16 %v255
  %v1063 = vunpack.c.h.b16 %v255
  %v1064 = vunpack.c.l.b16 %v256
  %v1065 = vunpack.c.h.b16 %v256
  %v1066 = vunpack.c.l.b16 %v257
  %v1067 = vunpack.c.h.b16 %v257
  %v1068 = vunpack.c.l.b16 %v258
  %v1069 = vunpack.c.h.b16 %v258
  %v1070 = vunpack.c.l.b16 %v259
  %v1071 = vunpack.c.h.b16 %v259
  %v1072 = vunpack.c.l.b16 %v260
  %v1073 = vunpack.c.h.b16 %v260
  %v1074 = vunpack.c.l.b16 %v261
  %v1075 = vunpack.c.h.b16 %v261
  %v1076 = vunpack.c.l.b16 %v262
  %v1077 = vunpack.c.h.b16 %v262
  %v1078 = vunpack.c.l.b16 %v263
  %v1079 = vunpack.c.h.b16 %v263
  %v1080 = vunpack.c.l.b16 %v264
  %v1081 = vunpack.c.h.b16 %v264
  %v1082 = vunpack.c.l.b16 %v265
  %v1083 = vunpack.c.h.b16 %v265
  %v1084 = vunpack.c.l.b16 %v266
  %v1085 = vunpack.c.h.b16 %v266
  %v1086 = vunpack.c.l.b16 %v267
  %v1087 = vunpack.c.h.b16 %v267
  %v1088 = vunpack.c.l.b16 %v268
  %v1089 = vunpack.c.h.b16 %v268
  %v1090 = vunpack.c.l.b16 %v269
  %v1091 = vunpack.c.h.b16 %v269
  %v1092 = vunpack.c.l.b16 %v270
  %v1093 = vunpack.c.h.b16 %v270
  %v1094 = vunpack.c.l.b16 %v271
  %v1095 = vunpack.c.h.b16 %v271
  %v1096 = vunpack.c.l.b16 %v272
  %v1097 = vunpack.c.h.b16 %v272
  %v1098 = vunpack.c.l.b16 %v273
  %v1099 = vunpack.c.h.b16 %v273
  %v1100 = vunpack.c.l.b16 %v274
  %v1101 = vunpack.c.h.b16 %v274
  %v1102 = vunpack.c.l.b16 %v275
  %v1103 = vunpack.c.h.b16 %v275
  %v1104 = vunpack.c.l.b16 %v276
  %v1105 = vunpack.c.h.b16 %v276
  %v1106 = vunpack.c.l.b16 %v277
  %v1107 = vunpack.c.h.b16 %v277
  %v1108 = vpack.c.b16 %v598, %v596
  %v1109 = vpack.c.b16 %v599, %v597
  %v1110 = vpack.c.b16 %v602, %v600
  %v1111 = vpack.c.b16 %v603, %v601
  %v1112 = vpack.c.b16 %v606, %v604
  %v1113 = vpack.c.b16 %v607, %v605
  %v1114 = vpack.c.b16 %v610, %v608
  %v1115 = vpack.c.b16 %v611, %v609
  %v1116 = vpack.c.b16 %v614, %v612
  %v1117 = vpack.c.b16 %v615, %v613
  %v1118 = vpack.c.b16 %v618, %v616
  %v1119 = vpack.c.b16 %v619, %v617
  %v1120 = vpack.c.b16 %v622, %v620
  %v1121 = vpack.c.b16 %v623, %v621
  %v1122 = vpack.c.b16 %v626, %v624
  %v1123 = vpack.c.b16 %v627, %v625
  %v1124 = vpack.c.b16 %v630, %v628
  %v1125 = vpack.c.b16 %v631, %v629
  %v1126 = vpack.c.b16 %v634, %v632
  %v1127 = vpack.c.b16 %v635, %v633
  %v1128 = vpack.c.b16 %v638, %v636
  %v1129 = vpack.c.b16 %v639, %v637
  %v1130 = vpack.c.b16 %v642, %v640
  %v1131 = vpack.c.b16 %v643, %v641
  %v1132 = vpack.c.b16 %v646, %v644
  %v1133 = vpack.c.b16 %v647, %v645
  %v1134 = vpack.c.b16 %v650, %v648
  %v1135 = vpack.c.b16 %v651, %v649
  %v1136 = vpack.c.b16 %v654, %v652
  %v1137 = vpack.c.b16 %v655, %v653
  %v1138 = vpack.c.b16 %v658, %v656
  %v1139 = vpack.c.b16 %v659, %v657
  %v1140 = vpack.c.b16 %v662, %v660
  %v1141 = vpack.c.b16 %v663, %v661
  %v1142 = vpack.c.b16 %v666, %v664
  %v1143 = vpack.c.b16 %v667, %v665
  %v1144 = vpack.c.b16 %v670, %v668
  %v1145 = vpack.c.b16 %v671, %v669
  %v1146 = vpack.c.b16 %v674, %v672
  %v1147 = vpack.c.b16 %v675, %v673
  %v1148 = vpack.c.b16 %v678, %v676
  %v1149 = vpack.c.b16 %v679, %v677
  %v1150 = vpack.c.b16 %v682, %v680
  %v1151 = vpack.c.b16 %v683, %v681
  %v1152 = vpack.c.b16 %v686, %v684
  %v1153 = vpack.c.b16 %v687, %v685
  %v1154 = vpack.c.b16 %v690, %v688
  %v1155 = vpack.c.b16 %v691, %v689
  %v1156 = vpack.c.b16 %v694, %v692
  %v1157 = vpack.c.b16 %v695, %v693
  %v1158 = vpack.c.b16 %v698, %v696
  %v1159 = vpack.c.b16 %v699, %v697
  %v1160 = vpack.c.b16 %v702, %v700
  %v1161 = vpack.c.b16 %v703, %v701
  %v1162 = vpack.c.b16 %v706, %v704
  %v1163 = vpack.c.b16 %v707, %v705
  %v1164 = vpack.c.b16 %v710, %v708
  %v1165 = vpack.c.b16 %v711, %v709
  %v1166 = vpack.c.b16 %v714, %v712
  %v1167 = vpack.c.b16 %v715, %v713
  %v1168 = vpack.c.b16 %v718, %v716
  %v1169 = vpack.c.b16 %v719, %v717
  %v1170 = vpack.c.b16 %v722, %v720
  %v1171 = vpack.c.b16 %v723, %v721
  %v1172 = vpack.c.b16 %v726, %v724
  %v1173 = vpack.c.b16 %v727, %v725
  %v1174 = vpack.c.b16 %v730, %v728
  %v1175 = vpack.c.b16 %v731, %v729
  %v1176 = vpack.c.b16 %v734, %v732
  %v1177 = vpack.c.b16 %v735, %v733
  %v1178 = vpack.c.b16 %v738, %v736
  %v1179 = vpack.c.b16 %v739, %v737
  %v1180 = vpack.c.b16 %v742, %v740
  %v1181 = vpack.c.b16 %v743, %v741
  %v1182 = vpack.c.b16 %v746, %v744
  %v1183 = vpack.c.b16 %v747, %v745
  %v1184 = vpack.c.b16 %v750, %v748
  %v1185 = vpack.c.b16 %v751, %v749
  %v1186 = vpack.c.b16 %v754, %v752
  %v1187 = vpack.c.b16 %v755, %v753
  %v1188 = vpack.c.b16 %v758, %v756
  %v1189 = vpack.c.b16 %v759, %v757
  %v1190 = vpack.c.b16 %v762, %v760
  %v1191 = vpack.c.b16 %v763, %v761
  %v1192 = vpack.c.b16 %v766, %v764
  %v1193 = vpack.c.b16 %v767, %v765
  %v1194 = vpack.c.b16 %v770, %v768
  %v1195 = vpack.c.b16 %v771, %v769
  %v1196 = vpack.c.b16 %v774, %v772
  %v1197 = vpack.c.b16 %v775, %v773
  %v1198 = vpack.c.b16 %v778, %v776
  %v1199 = vpack.c.b16 %v779, %v777
  %v1200 = vpack.c.b16 %v782, %v780
  %v1201 = vpack.c.b16 %v783, %v781
  %v1202 = vpack.c.b16 %v786, %v784
  %v1203 = vpack.c.b16 %v787, %v785
  %v1204 = vpack.c.b16 %v790, %v788
  %v1205 = vpack.c.b16 %v791, %v789
  %v1206 = vpack.c.b16 %v794, %v792
  %v1207 = vpack.c.b16 %v795, %v793
  %v1208 = vpack.c.b16 %v798, %v796
  %v1209 = vpack.c.b16 %v799, %v797
  %v1210 = vpack.c.b16 %v802, %v800
  %v1211 = vpack.c.b16 %v803, %v801
  %v1212 = vpack.c.b16 %v806, %v804
  %v1213 = vpack.c.b16 %v807, %v805
  %v1214 = vpack.c.b16 %v810, %v808
  %v1215 = vpack.c.b16 %v811, %v809
  %v1216 = vpack.c.b16 %v814, %v812
  %v1217 = vpack.c.b16 %v815, %v813
  %v1218 = vpack.c.b16 %v818, %v816
  %v1219 = vpack.c.b16 %v819, %v817
  %v1220 = vpack.c.b16 %v822, %v820
  %v1221 = vpack.c.b16 %v823, %v821
  %v1222 = vpack.c.b16 %v826, %v824
  %v1223 = vpack.c.b16 %v827, %v825
  %v1224 = vpack.c.b16 %v830, %v828
  %v1225 = vpack.c.b16 %v831, %v829
  %v1226 = vpack.c.b16 %v834, %v832
  %v1227 = vpack.c.b16 %v835, %v833
  %v1228 = vpack.c.b16 %v838, %v836
  %v1229 = vpack.c.b16 %v839, %v837
  %v1230 = vpack.c.b16 %v842, %v840
  %v1231 = vpack.c.b16 %v843, %v841
  %v1232 = vpack.c.b16 %v846, %v844
  %v1233 = vpack.c.b16 %v847, %v845
  %v1234 = vpack.c.b16 %v850, %v848
  %v1235 = vpack.c.b16 %v851, %v849
  %v1236 = vpack.c.b16 %v854, %v852
  %v1237 = vpack.c.b16 %v855, %v853
  %v1238 = vpack.c.b16 %v858, %v856
  %v1239 = vpack.c.b16 %v859, %v857
  %v1240 = vpack.c.b16 %v862, %v860
  %v1241 = vpack.c.b16 %v863, %v861
  %v1242 = vpack.c.b16 %v866, %v864
  %v1243 = vpack.c.b16 %v867, %v865
  %v1244 = vpack.c.b16 %v870, %v868
  %v1245 = vpack.c.b16 %v871, %v869
  %v1246 = vpack.c.b16 %v874, %v872
  %v1247 = vpack.c.b16 %v875, %v873
  %v1248 = vpack.c.b16 %v878, %v876
  %v1249 = vpack.c.b16 %v879, %v877
  %v1250 = vpack.c.b16 %v882, %v880
  %v1251 = vpack.c.b16 %v883, %v881
  %v1252 = vpack.c.b16 %v886, %v884
  %v1253 = vpack.c.b16 %v887, %v885
  %v1254 = vpack.c.b16 %v890, %v888
  %v1255 = vpack.c.b16 %v891, %v889
  %v1256 = vpack.c.b16 %v894, %v892
  %v1257 = vpack.c.b16 %v895, %v893
  %v1258 = vpack.c.b16 %v898, %v896
  %v1259 = vpack.c.b16 %v899, %v897
  %v1260 = vpack.c.b16 %v902, %v900
  %v1261 = vpack.c.b16 %v903, %v901
  %v1262 = vpack.c.b16 %v906, %v904
  %v1263 = vpack.c.b16 %v907, %v905
  %v1264 = vpack.c.b16 %v910, %v908
  %v1265 = vpack.c.b16 %v911, %v909
  %v1266 = vpack.c.b16 %v914, %v912
  %v1267 = vpack.c.b16 %v915, %v913
  %v1268 = vpack.c.b16 %v918, %v916
  %v1269 = vpack.c.b16 %v919, %v917
  %v1270 = vpack.c.b16 %v922, %v920
  %v1271 = vpack.c.b16 %v923, %v921
  %v1272 = vpack.c.b16 %v926, %v924
  %v1273 = vpack.c.b16 %v927, %v925
  %v1274 = vpack.c.b16 %v930, %v928
  %v1275 = vpack.c.b16 %v931, %v929
  %v1276 = vpack.c.b16 %v934, %v932
  %v1277 = vpack.c.b16 %v935, %v933
  %v1278 = vpack.c.b16 %v938, %v936
  %v1279 = vpack.c.b16 %v939, %v937
  %v1280 = vpack.c.b16 %v942, %v940
  %v1281 = vpack.c.b16 %v943, %v941
  %v1282 = vpack.c.b16 %v946, %v944
  %v1283 = vpack.c.b16 %v947, %v945
  %v1284 = vpack.c.b16 %v950, %v948
  %v1285 = vpack.c.b16 %v951, %v949
  %v1286 = vpack.c.b16 %v954, %v952
  %v1287 = vpack.c.b16 %v955, %v953
  %v1288 = vpack.c.b16 %v958, %v956
  %v1289 = vpack.c.b16 %v959, %v957
  %v1290 = vpack.c.b16 %v962, %v960
  %v1291 = vpack.c.b16 %v963, %v961
  %v1292 = vpack.c.b16 %v966, %v964
  %v1293 = vpack.c.b16 %v967, %v965
  %v1294 = vpack.c.b16 %v970, %v968
  %v1295 = vpack.c.b16 %v971, %v969
  %v1296 = vpack.c.b16 %v974, %v972
  %v1297 = vpack.c.b16 %v975, %v973
  %v1298 = vpack.c.b16 %v978, %v976
  %v1299 = vpack.c.b16 %v979, %v977
  %v1300 = vpack.c.b16 %v982, %v980
  %v1301 = vpack.c.b16 %v983, %v981
  %v1302 = vpack.c.b16 %v986, %v984
  %v1303 = vpack.c.b16 %v987, %v985
  %v1304 = vpack.c.b16 %v990, %v988
  %v1305 = vpack.c.b16 %v991, %v989
  %v1306 = vpack.c.b16 %v994, %v992
  %v1307 = vpack.c.b16 %v995, %v993
  %v1308 = vpack.c.b16 %v998, %v996
  %v1309 = vpack.c.b16 %v999, %v997
  %v1310 = vpack.c.b16 %v1002, %v1000
  %v1311 = vpack.c.b16 %v1003, %v1001
  %v1312 = vpack.c.b16 %v1006, %v1004
  %v1313 = vpack.c.b16 %v1007, %v1005
  %v1314 = vpack.c.b16 %v1010, %v1008
  %v1315 = vpack.c.b16 %v1011, %v1009
  %v1316 = vpack.c.b16 %v1014, %v1012
  %v1317 = vpack.c.b16 %v1015, %v1013
  %v1318 = vpack.c.b16 %v1018, %v1016
  %v1319 = vpack.c.b16 %v1019, %v1017
  %v1320 = vpack.c.b16 %v1022, %v1020
  %v1321 = vpack.c.b16 %v1023, %v1021
  %v1322 = vpack.c.b16 %v1026, %v1024
  %v1323 = vpack.c.b16 %v1027, %v1025
  %v1324 = vpack.c.b16 %v1030, %v1028
  %v1325 = vpack.c.b16 %v1031, %v1029
  %v1326 = vpack.c.b16 %v1034, %v1032
  %v1327 = vpack.c.b16 %v1035, %v1033
  %v1328 = vpack.c.b16 %v1038, %v1036
  %v1329 = vpack.c.b16 %v1039, %v1037
  %v1330 = vpack.c.b16 %v1042, %v1040
  %v1331 = vpack.c.b16 %v1043, %v1041
  %v1332 = vpack.c.b16 %v1046, %v1044
  %v1333 = vpack.c.b16 %v1047, %v1045
  %v1334 = vpack.c.b16 %v1050, %v1048
  %v1335 = vpack.c.b16 %v1051, %v1049
  %v1336 = vpack.c.b16 %v1054, %v1052
  %v1337 = vpack.c.b16 %v1055, %v1053
  %v1338 = vpack.c.b16 %v1058, %v1056
  %v1339 = vpack.c.b16 %v1059, %v1057
  %v1340 = vpack.c.b16 %v1062, %v1060
  %v1341 = vpack.c.b16 %v1063, %v1061
  %v1342 = vpack.c.b16 %v1066, %v1064
  %v1343 = vpack.c.b16 %v1067, %v1065
  %v1344 = vpack.c.b16 %v1070, %v1068
  %v1345 = vpack.c.b16 %v1071, %v1069
  %v1346 = vpack.c.b16 %v1074, %v1072
  %v1347 = vpack.c.b16 %v1075, %v1073
  %v1348 = vpack.c.b16 %v1078, %v1076
  %v1349 = vpack.c.b16 %v1079, %v1077
  %v1350 = vpack.c.b16 %v1082, %v1080
  %v1351 = vpack.c.b16 %v1083, %v1081
  %v1352 = vpack.c.b16 %v1086, %v1084
  %v1353 = vpack.c.b16 %v1087, %v1085
  %v1354 = vpack.c.b16 %v1090, %v1088
  %v1355 = vpack.c.b16 %v1091, %v1089
  %v1356 = vpack.c.b16 %v1094, %v1092
  %v1357 = vpack.c.b16 %v1095, %v1093
  %v1358 = vpack.c.b16 %v1098, %v1096
  %v1359 = vpack.c.b16 %v1099, %v1097
  %v1360 = vpack.c.b16 %v1102, %v1100
  %v1361 = vpack.c.b16 %v1103, %v1101
  %v1362 = vpack.c.b16 %v1106, %v1104
  %v1363 = vpack.c.b16 %v1107, %v1105
  %1620 = vmatpush.bf16.msra.mxu0 %v1122
  %1621 = vmatpush.bf16.msra.mxu0 %v1120
  %1622 = vmatpush.bf16.msra.mxu0 %v1118
  %1623 = vmatpush.bf16.msra.mxu0 %v1116
  %1624 = vmatpush.bf16.msra.mxu0 %v1114
  %1625 = vmatpush.bf16.msra.mxu0 %v1112
  %1626 = vmatpush.bf16.msra.mxu0 %v1110
  %1627 = vmatpush.bf16.msra.mxu0 %v1108
  %1628 = vmatmul.bf16.gmra.mxu0 %v308
  %v1629 = vpop.f32.mrf.mxu0
  %v1630 = vadd.f32 %v280, %v1629
  %v1631 = vpop.f32.mrf.mxu0
  %1632 = vdwg.mxu0
  %1633 = vmatpush.bf16.msra.mxu0 %v1138
  %1634 = vmatpush.bf16.msra.mxu0 %v1136
  %1635 = vmatpush.bf16.msra.mxu0 %v1134
  %1636 = vmatpush.bf16.msra.mxu0 %v1132
  %1637 = vmatpush.bf16.msra.mxu0 %v1130
  %1638 = vmatpush.bf16.msra.mxu0 %v1128
  %1639 = vmatpush.bf16.msra.mxu0 %v1126
  %1640 = vmatpush.bf16.msra.mxu0 %v1124
  %1641 = vmatmul.bf16.gmra.mxu0 %v309
  %v1642 = vpop.f32.mrf.mxu0
  %v1643 = vadd.f32 %v1630, %v1642
  %v1644 = vpop.f32.mrf.mxu0
  %1645 = vdwg.mxu0
  %1646 = vmatpush.bf16.msra.mxu0 %v1154
  %1647 = vmatpush.bf16.msra.mxu0 %v1152
  %1648 = vmatpush.bf16.msra.mxu0 %v1150
  %1649 = vmatpush.bf16.msra.mxu0 %v1148
  %1650 = vmatpush.bf16.msra.mxu0 %v1146
  %1651 = vmatpush.bf16.msra.mxu0 %v1144
  %1652 = vmatpush.bf16.msra.mxu0 %v1142
  %1653 = vmatpush.bf16.msra.mxu0 %v1140
  %1654 = vmatmul.bf16.gmra.mxu0 %v310
  %v1655 = vpop.f32.mrf.mxu0
  %v1656 = vadd.f32 %v1643, %v1655
  %v1657 = vpop.f32.mrf.mxu0
  %1658 = vdwg.mxu0
  %1659 = vmatpush.bf16.msra.mxu0 %v1170
  %1660 = vmatpush.bf16.msra.mxu0 %v1168
  %1661 = vmatpush.bf16.msra.mxu0 %v1166
  %1662 = vmatpush.bf16.msra.mxu0 %v1164
  %1663 = vmatpush.bf16.msra.mxu0 %v1162
  %1664 = vmatpush.bf16.msra.mxu0 %v1160
  %1665 = vmatpush.bf16.msra.mxu0 %v1158
  %1666 = vmatpush.bf16.msra.mxu0 %v1156
  %1667 = vmatmul.bf16.gmra.mxu0 %v311
  %v1668 = vpop.f32.mrf.mxu0
  %v1669 = vadd.f32 %v1656, %v1668
  %v1670 = vpop.f32.mrf.mxu0
  %1671 = vdwg.mxu0
  %1672 = vmatpush.bf16.msra.mxu0 %v1186
  %1673 = vmatpush.bf16.msra.mxu0 %v1184
  %1674 = vmatpush.bf16.msra.mxu0 %v1182
  %1675 = vmatpush.bf16.msra.mxu0 %v1180
  %1676 = vmatpush.bf16.msra.mxu0 %v1178
  %1677 = vmatpush.bf16.msra.mxu0 %v1176
  %1678 = vmatpush.bf16.msra.mxu0 %v1174
  %1679 = vmatpush.bf16.msra.mxu0 %v1172
  %1680 = vmatmul.bf16.gmra.mxu0 %v312
  %v1681 = vpop.f32.mrf.mxu0
  %v1682 = vadd.f32 %v1669, %v1681
  %v1683 = vpop.f32.mrf.mxu0
  %1684 = vdwg.mxu0
  %1685 = vmatpush.bf16.msra.mxu0 %v1202
  %1686 = vmatpush.bf16.msra.mxu0 %v1200
  %1687 = vmatpush.bf16.msra.mxu0 %v1198
  %1688 = vmatpush.bf16.msra.mxu0 %v1196
  %1689 = vmatpush.bf16.msra.mxu0 %v1194
  %1690 = vmatpush.bf16.msra.mxu0 %v1192
  %1691 = vmatpush.bf16.msra.mxu0 %v1190
  %1692 = vmatpush.bf16.msra.mxu0 %v1188
  %1693 = vmatmul.bf16.gmra.mxu0 %v313
  %v1694 = vpop.f32.mrf.mxu0
  %v1695 = vadd.f32 %v1682, %v1694
  %v1696 = vpop.f32.mrf.mxu0
  %1697 = vdwg.mxu0
  %1698 = vmatpush.bf16.msra.mxu0 %v1218
  %1699 = vmatpush.bf16.msra.mxu0 %v1216
  %1700 = vmatpush.bf16.msra.mxu0 %v1214
  %1701 = vmatpush.bf16.msra.mxu0 %v1212
  %1702 = vmatpush.bf16.msra.mxu0 %v1210
  %1703 = vmatpush.bf16.msra.mxu0 %v1208
  %1704 = vmatpush.bf16.msra.mxu0 %v1206
  %1705 = vmatpush.bf16.msra.mxu0 %v1204
  %1706 = vmatmul.bf16.gmra.mxu0 %v314
  %v1707 = vpop.f32.mrf.mxu0
  %v1708 = vadd.f32 %v1695, %v1707
  %v1709 = vpop.f32.mrf.mxu0
  %1710 = vdwg.mxu0
  %1711 = vmatpush.bf16.msra.mxu0 %v1234
  %1712 = vmatpush.bf16.msra.mxu0 %v1232
  %1713 = vmatpush.bf16.msra.mxu0 %v1230
  %1714 = vmatpush.bf16.msra.mxu0 %v1228
  %1715 = vmatpush.bf16.msra.mxu0 %v1226
  %1716 = vmatpush.bf16.msra.mxu0 %v1224
  %1717 = vmatpush.bf16.msra.mxu0 %v1222
  %1718 = vmatpush.bf16.msra.mxu0 %v1220
  %1719 = vmatmul.bf16.gmra.mxu0 %v315
  %v1720 = vpop.f32.mrf.mxu0
  %v1721 = vadd.f32 %v1708, %v1720
  %v1722 = vpop.f32.mrf.mxu0
  %1723 = vdwg.mxu0
  %1724 = vmatpush.bf16.msra.mxu0 %v1250
  %1725 = vmatpush.bf16.msra.mxu0 %v1248
  %1726 = vmatpush.bf16.msra.mxu0 %v1246
  %1727 = vmatpush.bf16.msra.mxu0 %v1244
  %1728 = vmatpush.bf16.msra.mxu0 %v1242
  %1729 = vmatpush.bf16.msra.mxu0 %v1240
  %1730 = vmatpush.bf16.msra.mxu0 %v1238
  %1731 = vmatpush.bf16.msra.mxu0 %v1236
  %1732 = vmatmul.bf16.gmra.mxu0 %v316
  %v1733 = vpop.f32.mrf.mxu0
  %v1734 = vadd.f32 %v1721, %v1733
  %v1735 = vpop.f32.mrf.mxu0
  %1736 = vdwg.mxu0
  %1737 = vmatpush.bf16.msra.mxu0 %v1266
  %1738 = vmatpush.bf16.msra.mxu0 %v1264
  %1739 = vmatpush.bf16.msra.mxu0 %v1262
  %1740 = vmatpush.bf16.msra.mxu0 %v1260
  %1741 = vmatpush.bf16.msra.mxu0 %v1258
  %1742 = vmatpush.bf16.msra.mxu0 %v1256
  %1743 = vmatpush.bf16.msra.mxu0 %v1254
  %1744 = vmatpush.bf16.msra.mxu0 %v1252
  %1745 = vmatmul.bf16.gmra.mxu0 %v317
  %v1746 = vpop.f32.mrf.mxu0
  %v1747 = vadd.f32 %v1734, %v1746
  %v1748 = vpop.f32.mrf.mxu0
  %1749 = vdwg.mxu0
  %1750 = vmatpush.bf16.msra.mxu0 %v1282
  %1751 = vmatpush.bf16.msra.mxu0 %v1280
  %1752 = vmatpush.bf16.msra.mxu0 %v1278
  %1753 = vmatpush.bf16.msra.mxu0 %v1276
  %1754 = vmatpush.bf16.msra.mxu0 %v1274
  %1755 = vmatpush.bf16.msra.mxu0 %v1272
  %1756 = vmatpush.bf16.msra.mxu0 %v1270
  %1757 = vmatpush.bf16.msra.mxu0 %v1268
  %1758 = vmatmul.bf16.gmra.mxu0 %v318
  %v1759 = vpop.f32.mrf.mxu0
  %v1760 = vadd.f32 %v1747, %v1759
  %v1761 = vpop.f32.mrf.mxu0
  %1762 = vdwg.mxu0
  %1763 = vmatpush.bf16.msra.mxu0 %v1298
  %1764 = vmatpush.bf16.msra.mxu0 %v1296
  %1765 = vmatpush.bf16.msra.mxu0 %v1294
  %1766 = vmatpush.bf16.msra.mxu0 %v1292
  %1767 = vmatpush.bf16.msra.mxu0 %v1290
  %1768 = vmatpush.bf16.msra.mxu0 %v1288
  %1769 = vmatpush.bf16.msra.mxu0 %v1286
  %1770 = vmatpush.bf16.msra.mxu0 %v1284
  %1771 = vmatmul.bf16.gmra.mxu0 %v319
  %v1772 = vpop.f32.mrf.mxu0
  %v1773 = vadd.f32 %v1760, %v1772
  %v1774 = vpop.f32.mrf.mxu0
  %1775 = vdwg.mxu0
  %1776 = vmatpush.bf16.msra.mxu0 %v1314
  %1777 = vmatpush.bf16.msra.mxu0 %v1312
  %1778 = vmatpush.bf16.msra.mxu0 %v1310
  %1779 = vmatpush.bf16.msra.mxu0 %v1308
  %1780 = vmatpush.bf16.msra.mxu0 %v1306
  %1781 = vmatpush.bf16.msra.mxu0 %v1304
  %1782 = vmatpush.bf16.msra.mxu0 %v1302
  %1783 = vmatpush.bf16.msra.mxu0 %v1300
  %1784 = vmatmul.bf16.gmra.mxu0 %v320
  %v1785 = vpop.f32.mrf.mxu0
  %v1786 = vadd.f32 %v1773, %v1785
  %v1787 = vpop.f32.mrf.mxu0
  %1788 = vdwg.mxu0
  %1789 = vmatpush.bf16.msra.mxu0 %v1330
  %1790 = vmatpush.bf16.msra.mxu0 %v1328
  %1791 = vmatpush.bf16.msra.mxu0 %v1326
  %1792 = vmatpush.bf16.msra.mxu0 %v1324
  %1793 = vmatpush.bf16.msra.mxu0 %v1322
  %1794 = vmatpush.bf16.msra.mxu0 %v1320
  %1795 = vmatpush.bf16.msra.mxu0 %v1318
  %1796 = vmatpush.bf16.msra.mxu0 %v1316
  %1797 = vmatmul.bf16.gmra.mxu0 %v321
  %v1798 = vpop.f32.mrf.mxu0
  %v1799 = vadd.f32 %v1786, %v1798
  %v1800 = vpop.f32.mrf.mxu0
  %1801 = vdwg.mxu0
  %1802 = vmatpush.bf16.msra.mxu0 %v1346
  %1803 = vmatpush.bf16.msra.mxu0 %v1344
  %1804 = vmatpush.bf16.msra.mxu0 %v1342
  %1805 = vmatpush.bf16.msra.mxu0 %v1340
  %1806 = vmatpush.bf16.msra.mxu0 %v1338
  %1807 = vmatpush.bf16.msra.mxu0 %v1336
  %1808 = vmatpush.bf16.msra.mxu0 %v1334
  %1809 = vmatpush.bf16.msra.mxu0 %v1332
  %1810 = vmatmul.bf16.gmra.mxu0 %v322
  %v1811 = vpop.f32.mrf.mxu0
  %v1812 = vadd.f32 %v1799, %v1811
  %v1813 = vpop.f32.mrf.mxu0
  %1814 = vdwg.mxu0
  %1815 = vmatpush.bf16.msra.mxu0 %v1362
  %1816 = vmatpush.bf16.msra.mxu0 %v1360
  %1817 = vmatpush.bf16.msra.mxu0 %v1358
  %1818 = vmatpush.bf16.msra.mxu0 %v1356
  %1819 = vmatpush.bf16.msra.mxu0 %v1354
  %1820 = vmatpush.bf16.msra.mxu0 %v1352
  %1821 = vmatpush.bf16.msra.mxu0 %v1350
  %1822 = vmatpush.bf16.msra.mxu0 %v1348
  %1823 = vmatmul.bf16.gmra.mxu0 %v323
  %v1824 = vpop.f32.mrf.mxu0
  %v1825 = vadd.f32 %v1812, %v1824
  %v1826 = vpop.f32.mrf.mxu0
  %1827 = vdwg.mxu0
  %1828 = vmatpush.bf16.msra.mxu0 %v1123
  %1829 = vmatpush.bf16.msra.mxu0 %v1121
  %1830 = vmatpush.bf16.msra.mxu0 %v1119
  %1831 = vmatpush.bf16.msra.mxu0 %v1117
  %1832 = vmatpush.bf16.msra.mxu0 %v1115
  %1833 = vmatpush.bf16.msra.mxu0 %v1113
  %1834 = vmatpush.bf16.msra.mxu0 %v1111
  %1835 = vmatpush.bf16.msra.mxu0 %v1109
  %1836 = vmatmul.bf16.gmra.mxu0 %v308
  %v1837 = vpop.f32.mrf.mxu0
  %v1838 = vadd.f32 %v281, %v1837
  %v1839 = vpop.f32.mrf.mxu0
  %1840 = vdwg.mxu0
  %1841 = vmatpush.bf16.msra.mxu0 %v1139
  %1842 = vmatpush.bf16.msra.mxu0 %v1137
  %1843 = vmatpush.bf16.msra.mxu0 %v1135
  %1844 = vmatpush.bf16.msra.mxu0 %v1133
  %1845 = vmatpush.bf16.msra.mxu0 %v1131
  %1846 = vmatpush.bf16.msra.mxu0 %v1129
  %1847 = vmatpush.bf16.msra.mxu0 %v1127
  %1848 = vmatpush.bf16.msra.mxu0 %v1125
  %1849 = vmatmul.bf16.gmra.mxu0 %v309
  %v1850 = vpop.f32.mrf.mxu0
  %v1851 = vadd.f32 %v1838, %v1850
  %v1852 = vpop.f32.mrf.mxu0
  %1853 = vdwg.mxu0
  %1854 = vmatpush.bf16.msra.mxu0 %v1155
  %1855 = vmatpush.bf16.msra.mxu0 %v1153
  %1856 = vmatpush.bf16.msra.mxu0 %v1151
  %1857 = vmatpush.bf16.msra.mxu0 %v1149
  %1858 = vmatpush.bf16.msra.mxu0 %v1147
  %1859 = vmatpush.bf16.msra.mxu0 %v1145
  %1860 = vmatpush.bf16.msra.mxu0 %v1143
  %1861 = vmatpush.bf16.msra.mxu0 %v1141
  %1862 = vmatmul.bf16.gmra.mxu0 %v310
  %v1863 = vpop.f32.mrf.mxu0
  %v1864 = vadd.f32 %v1851, %v1863
  %v1865 = vpop.f32.mrf.mxu0
  %1866 = vdwg.mxu0
  %1867 = vmatpush.bf16.msra.mxu0 %v1171
  %1868 = vmatpush.bf16.msra.mxu0 %v1169
  %1869 = vmatpush.bf16.msra.mxu0 %v1167
  %1870 = vmatpush.bf16.msra.mxu0 %v1165
  %1871 = vmatpush.bf16.msra.mxu0 %v1163
  %1872 = vmatpush.bf16.msra.mxu0 %v1161
  %1873 = vmatpush.bf16.msra.mxu0 %v1159
  %1874 = vmatpush.bf16.msra.mxu0 %v1157
  %1875 = vmatmul.bf16.gmra.mxu0 %v311
  %v1876 = vpop.f32.mrf.mxu0
  %v1877 = vadd.f32 %v1864, %v1876
  %v1878 = vpop.f32.mrf.mxu0
  %1879 = vdwg.mxu0
  %1880 = vmatpush.bf16.msra.mxu0 %v1187
  %1881 = vmatpush.bf16.msra.mxu0 %v1185
  %1882 = vmatpush.bf16.msra.mxu0 %v1183
  %1883 = vmatpush.bf16.msra.mxu0 %v1181
  %1884 = vmatpush.bf16.msra.mxu0 %v1179
  %1885 = vmatpush.bf16.msra.mxu0 %v1177
  %1886 = vmatpush.bf16.msra.mxu0 %v1175
  %1887 = vmatpush.bf16.msra.mxu0 %v1173
  %1888 = vmatmul.bf16.gmra.mxu0 %v312
  %v1889 = vpop.f32.mrf.mxu0
  %v1890 = vadd.f32 %v1877, %v1889
  %v1891 = vpop.f32.mrf.mxu0
  %1892 = vdwg.mxu0
  %1893 = vmatpush.bf16.msra.mxu0 %v1203
  %1894 = vmatpush.bf16.msra.mxu0 %v1201
  %1895 = vmatpush.bf16.msra.mxu0 %v1199
  %1896 = vmatpush.bf16.msra.mxu0 %v1197
  %1897 = vmatpush.bf16.msra.mxu0 %v1195
  %1898 = vmatpush.bf16.msra.mxu0 %v1193
  %1899 = vmatpush.bf16.msra.mxu0 %v1191
  %1900 = vmatpush.bf16.msra.mxu0 %v1189
  %1901 = vmatmul.bf16.gmra.mxu0 %v313
  %v1902 = vpop.f32.mrf.mxu0
  %v1903 = vadd.f32 %v1890, %v1902
  %v1904 = vpop.f32.mrf.mxu0
  %1905 = vdwg.mxu0
  %1906 = vmatpush.bf16.msra.mxu0 %v1219
  %1907 = vmatpush.bf16.msra.mxu0 %v1217
  %1908 = vmatpush.bf16.msra.mxu0 %v1215
  %1909 = vmatpush.bf16.msra.mxu0 %v1213
  %1910 = vmatpush.bf16.msra.mxu0 %v1211
  %1911 = vmatpush.bf16.msra.mxu0 %v1209
  %1912 = vmatpush.bf16.msra.mxu0 %v1207
  %1913 = vmatpush.bf16.msra.mxu0 %v1205
  %1914 = vmatmul.bf16.gmra.mxu0 %v314
  %v1915 = vpop.f32.mrf.mxu0
  %v1916 = vadd.f32 %v1903, %v1915
  %v1917 = vpop.f32.mrf.mxu0
  %1918 = vdwg.mxu0
  %1919 = vmatpush.bf16.msra.mxu0 %v1235
  %1920 = vmatpush.bf16.msra.mxu0 %v1233
  %1921 = vmatpush.bf16.msra.mxu0 %v1231
  %1922 = vmatpush.bf16.msra.mxu0 %v1229
  %1923 = vmatpush.bf16.msra.mxu0 %v1227
  %1924 = vmatpush.bf16.msra.mxu0 %v1225
  %1925 = vmatpush.bf16.msra.mxu0 %v1223
  %1926 = vmatpush.bf16.msra.mxu0 %v1221
  %1927 = vmatmul.bf16.gmra.mxu0 %v315
  %v1928 = vpop.f32.mrf.mxu0
  %v1929 = vadd.f32 %v1916, %v1928
  %v1930 = vpop.f32.mrf.mxu0
  %1931 = vdwg.mxu0
  %1932 = vmatpush.bf16.msra.mxu0 %v1251
  %1933 = vmatpush.bf16.msra.mxu0 %v1249
  %1934 = vmatpush.bf16.msra.mxu0 %v1247
  %1935 = vmatpush.bf16.msra.mxu0 %v1245
  %1936 = vmatpush.bf16.msra.mxu0 %v1243
  %1937 = vmatpush.bf16.msra.mxu0 %v1241
  %1938 = vmatpush.bf16.msra.mxu0 %v1239
  %1939 = vmatpush.bf16.msra.mxu0 %v1237
  %1940 = vmatmul.bf16.gmra.mxu0 %v316
  %v1941 = vpop.f32.mrf.mxu0
  %v1942 = vadd.f32 %v1929, %v1941
  %v1943 = vpop.f32.mrf.mxu0
  %1944 = vdwg.mxu0
  %1945 = vmatpush.bf16.msra.mxu0 %v1267
  %1946 = vmatpush.bf16.msra.mxu0 %v1265
  %1947 = vmatpush.bf16.msra.mxu0 %v1263
  %1948 = vmatpush.bf16.msra.mxu0 %v1261
  %1949 = vmatpush.bf16.msra.mxu0 %v1259
  %1950 = vmatpush.bf16.msra.mxu0 %v1257
  %1951 = vmatpush.bf16.msra.mxu0 %v1255
  %1952 = vmatpush.bf16.msra.mxu0 %v1253
  %1953 = vmatmul.bf16.gmra.mxu0 %v317
  %v1954 = vpop.f32.mrf.mxu0
  %v1955 = vadd.f32 %v1942, %v1954
  %v1956 = vpop.f32.mrf.mxu0
  %1957 = vdwg.mxu0
  %1958 = vmatpush.bf16.msra.mxu0 %v1283
  %1959 = vmatpush.bf16.msra.mxu0 %v1281
  %1960 = vmatpush.bf16.msra.mxu0 %v1279
  %1961 = vmatpush.bf16.msra.mxu0 %v1277
  %1962 = vmatpush.bf16.msra.mxu0 %v1275
  %1963 = vmatpush.bf16.msra.mxu0 %v1273
  %1964 = vmatpush.bf16.msra.mxu0 %v1271
  %1965 = vmatpush.bf16.msra.mxu0 %v1269
  %1966 = vmatmul.bf16.gmra.mxu0 %v318
  %v1967 = vpop.f32.mrf.mxu0
  %v1968 = vadd.f32 %v1955, %v1967
  %v1969 = vpop.f32.mrf.mxu0
  %1970 = vdwg.mxu0
  %1971 = vmatpush.bf16.msra.mxu0 %v1299
  %1972 = vmatpush.bf16.msra.mxu0 %v1297
  %1973 = vmatpush.bf16.msra.mxu0 %v1295
  %1974 = vmatpush.bf16.msra.mxu0 %v1293
  %1975 = vmatpush.bf16.msra.mxu0 %v1291
  %1976 = vmatpush.bf16.msra.mxu0 %v1289
  %1977 = vmatpush.bf16.msra.mxu0 %v1287
  %1978 = vmatpush.bf16.msra.mxu0 %v1285
  %1979 = vmatmul.bf16.gmra.mxu0 %v319
  %v1980 = vpop.f32.mrf.mxu0
  %v1981 = vadd.f32 %v1968, %v1980
  %v1982 = vpop.f32.mrf.mxu0
  %1983 = vdwg.mxu0
  %1984 = vmatpush.bf16.msra.mxu0 %v1315
  %1985 = vmatpush.bf16.msra.mxu0 %v1313
  %1986 = vmatpush.bf16.msra.mxu0 %v1311
  %1987 = vmatpush.bf16.msra.mxu0 %v1309
  %1988 = vmatpush.bf16.msra.mxu0 %v1307
  %1989 = vmatpush.bf16.msra.mxu0 %v1305
  %1990 = vmatpush.bf16.msra.mxu0 %v1303
  %1991 = vmatpush.bf16.msra.mxu0 %v1301
  %1992 = vmatmul.bf16.gmra.mxu0 %v320
  %v1993 = vpop.f32.mrf.mxu0
  %v1994 = vadd.f32 %v1981, %v1993
  %v1995 = vpop.f32.mrf.mxu0
  %1996 = vdwg.mxu0
  %1997 = vmatpush.bf16.msra.mxu0 %v1331
  %1998 = vmatpush.bf16.msra.mxu0 %v1329
  %1999 = vmatpush.bf16.msra.mxu0 %v1327
  %2000 = vmatpush.bf16.msra.mxu0 %v1325
  %2001 = vmatpush.bf16.msra.mxu0 %v1323
  %2002 = vmatpush.bf16.msra.mxu0 %v1321
  %2003 = vmatpush.bf16.msra.mxu0 %v1319
  %2004 = vmatpush.bf16.msra.mxu0 %v1317
  %2005 = vmatmul.bf16.gmra.mxu0 %v321
  %v2006 = vpop.f32.mrf.mxu0
  %v2007 = vadd.f32 %v1994, %v2006
  %v2008 = vpop.f32.mrf.mxu0
  %2009 = vdwg.mxu0
  %2010 = vmatpush.bf16.msra.mxu0 %v1347
  %2011 = vmatpush.bf16.msra.mxu0 %v1345
  %2012 = vmatpush.bf16.msra.mxu0 %v1343
  %2013 = vmatpush.bf16.msra.mxu0 %v1341
  %2014 = vmatpush.bf16.msra.mxu0 %v1339
  %2015 = vmatpush.bf16.msra.mxu0 %v1337
  %2016 = vmatpush.bf16.msra.mxu0 %v1335
  %2017 = vmatpush.bf16.msra.mxu0 %v1333
  %2018 = vmatmul.bf16.gmra.mxu0 %v322
  %v2019 = vpop.f32.mrf.mxu0
  %v2020 = vadd.f32 %v2007, %v2019
  %v2021 = vpop.f32.mrf.mxu0
  %2022 = vdwg.mxu0
  %2023 = vmatpush.bf16.msra.mxu0 %v1363
  %2024 = vmatpush.bf16.msra.mxu0 %v1361
  %2025 = vmatpush.bf16.msra.mxu0 %v1359
  %2026 = vmatpush.bf16.msra.mxu0 %v1357
  %2027 = vmatpush.bf16.msra.mxu0 %v1355
  %2028 = vmatpush.bf16.msra.mxu0 %v1353
  %2029 = vmatpush.bf16.msra.mxu0 %v1351
  %2030 = vmatpush.bf16.msra.mxu0 %v1349
  %2031 = vmatmul.bf16.gmra.mxu0 %v323
  %v2032 = vpop.f32.mrf.mxu0
  %v2033 = vadd.f32 %v2020, %v2032
  %v2034 = vpop.f32.mrf.mxu0
  %2035 = vdwg.mxu0
  %v2036 = vmax.f32 %v1825, 0.0
  %v2037 = vmax.f32 %v2033, 0.0
  %v2038 = vpack.c.bf16 %v2037, %v2036
  %2039 = vst [vmem:[%s3] sm:$0xff] %v2038
  // Predicated region
  $region14: #{risk_detection_forward.6} parent=0 // pred_check
    _
  $region15: #{risk_detection_forward.6} parent=0 // pred_check_branch
    %2041 = sbr.rel (0) target = $region17
  $region16: #{risk_detection_forward.6} parent=0 // pred_region
    _
  $region17: #{risk_detection_forward.6} parent=0 // pred_fallthru
    _
  // Predicated region
  $region18: #{risk_detection_forward.6} parent=0 // pred_check
    _
  $region19: #{risk_detection_forward.6} parent=0 // pred_check_branch
    %2043 = sbr.rel (0) target = $region21
  $region20: #{risk_detection_forward.6} parent=0 // pred_region
    _
  $region21: #{risk_detection_forward.6} parent=0 // pred_fallthru
    _

</llo_original>
